<compile_context>
chip_gen: v7x
topology: tpu7x:2x2x1
jax: 0.10.0
libtpu: 0.0.40
codegen_flags: <defaults>
</compile_context>

<pallas_src>
import math

import jax
import jax.numpy as jnp
from jax import lax
from jax.experimental import pallas as pl
from jax.experimental.pallas import tpu as pltpu


def _round_up(x, m):
    return (x + m - 1) // m * m


def _vmem_limit_bytes():
    """Generation-aware VMEM budget (v5e/v6e: 128 MiB phys, v7x: 64 MiB)."""
    cap = 64 * 1024 * 1024
    try:
        info = pltpu.get_tpu_info()
        cap = int(getattr(info, "vmem_capacity_bytes", cap))
    except Exception:
        pass
    # Leave headroom for Mosaic internal scratch / semaphores.
    return min(int(cap * 3 // 4), 112 * 1024 * 1024)


# -----------------------------------------------------------------------------
# Kernel 1: conv matmul tile + global BN statistics accumulation
# -----------------------------------------------------------------------------
def _conv_stats_kernel(p_ref, w_ref, y_ref, sum_ref, sq_ref):
    # p_ref  : (TM, K_pad)      im2col patch tile (compute dtype)
    # w_ref  : (K_pad, C_pad)   conv weight matrix (resident across the grid)
    # y_ref  : (TM, C_pad)      pre-BN conv output tile (compute dtype)
    # sum_ref: (1, 1, C_pad)    per-shard channel sum      (resident f32 accumulator)
    # sq_ref : (1, 1, C_pad)    per-shard channel sum-of-squares
    i = pl.program_id(1)

    y = jnp.dot(p_ref[...], w_ref[...], preferred_element_type=jnp.float32)
    y_ref[...] = y.astype(y_ref.dtype)

    @pl.when(i == 0)
    def _():
        sum_ref[...] = jnp.zeros_like(sum_ref)
        sq_ref[...] = jnp.zeros_like(sq_ref)

    # Padded rows of the patch matrix are zero, so their matmul rows are exactly zero and
    # contribute nothing -> no masking needed.  (Conv bias is dropped before this point and
    # padding stays zero, which keeps this exact.)
    sum_ref[...] += jnp.sum(y, axis=0, keepdims=True)[None]
    sq_ref[...] += jnp.sum(y * y, axis=0, keepdims=True)[None]


# -----------------------------------------------------------------------------
# Kernel 2: folded BN affine + LeakyReLU(0.1)
# -----------------------------------------------------------------------------
def _bn_act_kernel(y_ref, scale_ref, shift_ref, o_ref):
    # y_ref: (TM2, C_pad) compute dtype; scale/shift: (1, C_pad) f32; o_ref: (TM2, C_pad) f32
    y = y_ref[...].astype(jnp.float32) * scale_ref[...] + shift_ref[...]
    o_ref[...] = jnp.where(y > 0, y, 0.1 * y).astype(o_ref.dtype)


# -----------------------------------------------------------------------------
# Wrapper: NCHW in, NCHW out (matches the PyTorch module's layout)
# -----------------------------------------------------------------------------
def conv2d_norm_pallas(x, weight, bias, gamma, beta, *, stride=1, padding=0,
                       tile_m=512, compute_dtype=jnp.bfloat16, eps=1e-5):
    """x: (N, Cin, H, W) f32. weight: (Cout, Cin, KH, KW). Returns NCHW f32."""
    N, Cin, H, W = x.shape
    Cout, _, KH, KW = weight.shape
    OH = (H + 2 * padding - KH) // stride + 1
    OW = (W + 2 * padding - KW) // stride + 1
    M = N * OH * OW
    K = Cin * KH * KW

    # Training-mode BN subtracts the per-channel mean right after the conv, which cancels
    # any constant per-channel bias exactly -> skip adding it (zero accuracy change).
    del bias

    compute_dtype = jnp.dtype(compute_dtype)
    it = compute_dtype.itemsize

    # ---- glue: channels-last im2col, K ordered as (kh, kw, cin), built in compute_dtype ----
    # TODO(synk): replace with in-kernel DMA gather of shifted NHWC row windows.
    x_nhwc = jnp.transpose(x, (0, 2, 3, 1))
    xp = jnp.pad(x_nhwc, ((0, 0), (padding, padding), (padding, padding), (0, 0)))
    xp = xp.astype(compute_dtype)
    slices = []
    for kh in range(KH):
        for kw in range(KW):
            slices.append(
                xp[:, kh:kh + OH * stride:stride, kw:kw + OW * stride:stride, :])
    patches = jnp.concatenate(slices, axis=-1).reshape(M, K)

    # weight (Cout, Cin, KH, KW) -> (K, Cout), rows ordered (kh, kw, cin) to match patches
    w_mat = jnp.transpose(weight, (2, 3, 1, 0)).reshape(K, Cout).astype(compute_dtype)

    # ---- padding: lane-dense Cout, sublane-aligned K, tile-aligned M ----
    k_align = 16 if it == 2 else 8
    K_pad = _round_up(K, k_align)
    C_pad = _round_up(max(Cout, 128), 128)

    vmem_limit = _vmem_limit_bytes()

    def _pass1_vmem(tm):
        return (2 * tm * K_pad * it        # patch double buffer
                + 2 * K_pad * C_pad * it   # weights (worst case: double buffered)
                + 2 * tm * C_pad * it      # conv_out double buffer
                + tm * C_pad * 4           # f32 matmul result headroom
                + 16 * C_pad * 4)          # stats accumulators

    TM = _round_up(min(tile_m, max(M, 8)), 8)
    while TM > 64 and _pass1_vmem(TM) > vmem_limit:
        TM //= 2
    TM = max(_round_up(TM, 8), 8)

    M_pad = _round_up(M, TM)
    num_tiles = M_pad // TM
    # Leading "parallel" shard axis: lets a 2-TensorCore chip (v7x) split pass 1; on
    # single-core chips it is just a serial outer loop.
    split = 2 if (num_tiles >= 2 and num_tiles % 2 == 0) else 1
    tiles_per_core = num_tiles // split

    patches_p = jnp.pad(patches, ((0, M_pad - M), (0, K_pad - K)))
    w_p = jnp.pad(w_mat, ((0, K_pad - K), (0, C_pad - Cout)))

    cost = pl.CostEstimate(
        flops=2 * M_pad * K_pad * C_pad,
        transcendentals=0,
        bytes_accessed=it * (M_pad * K_pad + K_pad * C_pad + M_pad * C_pad)
        + 8 * split * C_pad,
    )

    # ---- pass 1: conv tiles + per-shard BN sum / sumsq ----
    def _call_pass1(single_buffer_weights):
        if single_buffer_weights:
            # Constant index_map -> double buffering the weights only wastes VMEM.
            w_spec = pl.BlockSpec((K_pad, C_pad), lambda c, i: (0, 0),
                                  pipeline_mode=pl.Buffered(1))
        else:
            w_spec = pl.BlockSpec((K_pad, C_pad), lambda c, i: (0, 0))
        return pl.pallas_call(
            _conv_stats_kernel,
            out_shape=(
                jax.ShapeDtypeStruct((M_pad, C_pad), compute_dtype),
                jax.ShapeDtypeStruct((split, 1, C_pad), jnp.float32),
                jax.ShapeDtypeStruct((split, 1, C_pad), jnp.float32),
            ),
            grid_spec=pltpu.PrefetchScalarGridSpec(
                num_scalar_prefetch=0,
                grid=(split, tiles_per_core),
                in_specs=[
                    pl.BlockSpec((TM, K_pad),
                                 lambda c, i: (c * tiles_per_core + i, 0)),
                    w_spec,
                ],
                out_specs=[
                    pl.BlockSpec((TM, C_pad),
                                 lambda c, i: (c * tiles_per_core + i, 0)),
                    pl.BlockSpec((1, 1, C_pad), lambda c, i: (c, 0, 0)),
                    pl.BlockSpec((1, 1, C_pad), lambda c, i: (c, 0, 0)),
                ],
            ),
            compiler_params=pltpu.CompilerParams(
                dimension_semantics=("parallel", "arbitrary"),
                vmem_limit_bytes=vmem_limit,
            ),
            cost_estimate=cost,
        )(patches_p, w_p)

    try:
        conv_out, sum_p, sumsq_p = _call_pass1(True)
    except Exception:
        # Fallback if this JAX build rejects pipeline_mode=pl.Buffered(1).
        conv_out, sum_p, sumsq_p = _call_pass1(False)

    # ---- fold BN into per-channel scale/shift (O(Cout) plain-JAX work) ----
    cnt = jnp.float32(M)
    s = jnp.sum(sum_p, axis=(0, 1))
    q = jnp.sum(sumsq_p, axis=(0, 1))
    mean = s / cnt
    # NOTE: E[y^2] - E[y]^2 in f32; conv outputs here are near zero-mean so cancellation is
    # benign (validated vs reference).  Use a Welford merge if M becomes very large.
    var = jnp.maximum(q / cnt - mean * mean, 0.0)
    gamma_p = jnp.pad(gamma.astype(jnp.float32), (0, C_pad - Cout))
    beta_p = jnp.pad(beta.astype(jnp.float32), (0, C_pad - Cout))
    inv = lax.rsqrt(var + eps)
    scale = (gamma_p * inv).reshape(1, C_pad)
    shift = (beta_p - mean * gamma_p * inv).reshape(1, C_pad)

    # ---- pass 2: folded affine + LeakyReLU(0.1), streaming, bigger tiles ----
    def _pass2_vmem(tm2):
        return 2 * tm2 * C_pad * (it + 4) + 8 * C_pad * 4

    best_f = 1
    for f in range(1, num_tiles + 1):
        rows = TM * f
        if num_tiles % f == 0 and rows <= max(2048, TM) and _pass2_vmem(rows) <= vmem_limit:
            best_f = f
    TM2 = TM * best_f
    tiles2 = M_pad // TM2

    # NOTE: input_output_aliases is skipped intentionally: conv_out is compute_dtype (bf16)
    # while the final output is f32, so in-place aliasing is not shape/dtype compatible.
    out_p = pl.pallas_call(
        _bn_act_kernel,
        out_shape=jax.ShapeDtypeStruct((M_pad, C_pad), jnp.float32),
        grid_spec=pltpu.PrefetchScalarGridSpec(
            num_scalar_prefetch=0,
            grid=(tiles2,),
            in_specs=[
                pl.BlockSpec((TM2, C_pad), lambda i: (i, 0)),
                pl.BlockSpec((1, C_pad), lambda i: (0, 0)),
                pl.BlockSpec((1, C_pad), lambda i: (0, 0)),
            ],
            out_specs=pl.BlockSpec((TM2, C_pad), lambda i: (i, 0)),
        ),
        compiler_params=pltpu.CompilerParams(
            dimension_semantics=("parallel",),
            vmem_limit_bytes=vmem_limit,
        ),
    )(conv_out, scale, shift)

    # slice off padding, back to NCHW (module contract)
    out = out_p[:M, :Cout].reshape(N, OH, OW, Cout)
    return jnp.transpose(out, (0, 3, 1, 2))


# -----------------------------------------------------------------------------
# Deterministic parameter init (mirrors the PyTorch module's __init__)
# -----------------------------------------------------------------------------
def init_params(key, in_channels, out_channels, kernel_size):
    fan_in = in_channels * kernel_size * kernel_size
    a = 0.1  # kaiming_normal_(m.weight, 0.1) -> leaky_relu gain with a=0.1
    gain = math.sqrt(2.0 / (1.0 + a * a))
    std = gain / math.sqrt(fan_in)
    weight = std * jax.random.normal(
        key, (out_channels, in_channels, kernel_size, kernel_size), jnp.float32)
    bias = jnp.zeros((out_channels,), jnp.float32)   # constant_(m.bias, 0)
    gamma = jnp.ones((out_channels,), jnp.float32)   # constant_(bn.weight, 1)
    beta = jnp.zeros((out_channels,), jnp.float32)   # constant_(bn.bias, 0)
    return weight, bias, gamma, beta


# -----------------------------------------------------------------------------
# Pure-JAX reference for a correctness check
# -----------------------------------------------------------------------------
def reference(x, weight, bias, gamma, beta, *, stride=1, padding=0):
    y = lax.conv_general_dilated(
        x, weight, window_strides=(stride, stride),
        padding=[(padding, padding), (padding, padding)],
        dimension_numbers=("NCHW", "OIHW", "NCHW"),
    )
    y = y + bias[None, :, None, None]
    mean = jnp.mean(y, axis=(0, 2, 3), keepdims=True)
    var = jnp.mean((y - mean) ** 2, axis=(0, 2, 3), keepdims=True)
    y = (y - mean) * lax.rsqrt(var + 1e-5)
    y = y * gamma[None, :, None, None] + beta[None, :, None, None]
    return jnp.where(y > 0, y, 0.1 * y)


if __name__ == "__main__":
    key = jax.random.PRNGKey(0)
    k_x, k_w = jax.random.split(key)

    # Small shapes: batch=2, in_channels=4, out_channels=8, spatial=16, 3x3, stride 1, pad 1
    N, Cin, H, W = 2, 4, 16, 16
    Cout, ksz, stride, pad = 8, 3, 1, 1

    x = jax.random.normal(k_x, (N, Cin, H, W), jnp.float32)
    weight, bias, gamma, beta = init_params(k_w, Cin, Cout, ksz)
    ref = reference(x, weight, bias, gamma, beta, stride=stride, padding=pad)

    # tile_m=128 -> M=512 splits into 4 tiles over a (2, 2) grid, exercising both the
    # cross-tile BN accumulation and the per-shard stats merge.
    out_bf16 = conv2d_norm_pallas(x, weight, bias, gamma, beta,
                                  stride=stride, padding=pad, tile_m=128)
    out_bf16 = jax.block_until_ready(out_bf16)
    assert out_bf16.shape == (N, Cout, H, W)
    assert jnp.allclose(out_bf16, ref, atol=5e-2, rtol=5e-2), "bf16 mismatch vs reference"

    # f32 compute path: validates kernel logic at tight tolerance.
    out_f32 = conv2d_norm_pallas(x, weight, bias, gamma, beta,
                                 stride=stride, padding=pad, tile_m=128,
                                 compute_dtype=jnp.float32)
    out_f32 = jax.block_until_ready(out_f32)
    assert out_f32.shape == (N, Cout, H, W)
    assert jnp.allclose(out_f32, ref, atol=2e-4, rtol=2e-4), "f32 mismatch vs reference"

    print("KERNEL_OK")
</pallas_src>

<mosaic_0001>
module attributes {stable_mosaic.version = 11 : i64} {
  func.func @_conv_stats_kernel(%arg0: i32, %arg1: i32, %arg2: memref<128x48xbf16, #tpu.memory_space<vmem>>, %arg3: memref<48x128xbf16, #tpu.memory_space<vmem>>, %arg4: memref<128x128xbf16, #tpu.memory_space<vmem>>, %arg5: memref<1x1x128xf32, #tpu.memory_space<vmem>>, %arg6: memref<1x1x128xf32, #tpu.memory_space<vmem>>) attributes {dimension_semantics = [#tpu.dimension_semantics<parallel>, #tpu.dimension_semantics<arbitrary>], iteration_bounds = array<i64: 2, 2>, scalar_prefetch = 0 : i64, scratch_operands = 0 : i64, tpu.core_type = #tpu.core_type<tc>, window_params = [{transform_indices = @transform_0, window_bounds = array<i64: 128, 48>}, {pipeline_mode = #tpu.pipeline_mode<synchronous>, transform_indices = @transform_1, window_bounds = array<i64: 48, 128>}, {transform_indices = @transform_2, window_bounds = array<i64: 128, 128>}, {transform_indices = @transform_3, window_bounds = array<i64: 1, 1, 128>}, {transform_indices = @transform_4, window_bounds = array<i64: 1, 1, 128>}]} {
    %c0 = arith.constant 0 : index
    %c0_0 = arith.constant 0 : index
    %0 = vector.load %arg2[%c0, %c0_0] : memref<128x48xbf16, #tpu.memory_space<vmem>>, vector<128x48xbf16>
    %c0_1 = arith.constant 0 : index
    %c0_2 = arith.constant 0 : index
    %1 = vector.load %arg3[%c0_1, %c0_2] : memref<48x128xbf16, #tpu.memory_space<vmem>>, vector<48x128xbf16>
    %cst = arith.constant dense<0.000000e+00> : vector<128x128xf32>
    %2 = tpu.matmul %0, %1, %cst {dimension_numbers = #tpu.dot_dimension_numbers<[1], [0], [0], [1], [0, 0, 1, 1], [], []>} : vector<128x48xbf16>, vector<48x128xbf16>, vector<128x128xf32> -> vector<128x128xf32>
    %3 = arith.truncf %2 : vector<128x128xf32> to vector<128x128xbf16>
    %c0_3 = arith.constant 0 : index
    %c0_4 = arith.constant 0 : index
    %4 = vector.load %arg4[%c0_3, %c0_4] : memref<128x128xbf16, #tpu.memory_space<vmem>>, vector<128x128xbf16>
    tpu.vector_store %arg4[%c0_3, %c0_4], %3 {strides = array<i32>} : memref<128x128xbf16, #tpu.memory_space<vmem>>, vector<128x128xbf16>,
    %c0_i32 = arith.constant 0 : i32
    %5 = arith.cmpi eq, %arg1, %c0_i32 : i32
    %6 = arith.extui %5 : i1 to i32
    %c0_i32_5 = arith.constant 0 : i32
    %7 = arith.cmpi ne, %6, %c0_i32_5 : i32
    scf.if %7 {
      %cst_20 = arith.constant 0.000000e+00 : f32
      %21 = vector.broadcast %cst_20 : f32 to vector<1x1x128xf32>
      %c0_21 = arith.constant 0 : index
      %c0_22 = arith.constant 0 : index
      %c0_23 = arith.constant 0 : index
      %22 = vector.load %arg5[%c0_21, %c0_22, %c0_23] : memref<1x1x128xf32, #tpu.memory_space<vmem>>, vector<1x1x128xf32>
      tpu.vector_store %arg5[%c0_21, %c0_22, %c0_23], %21 {strides = array<i32>} : memref<1x1x128xf32, #tpu.memory_space<vmem>>, vector<1x1x128xf32>,
      %cst_24 = arith.constant 0.000000e+00 : f32
      %23 = vector.broadcast %cst_24 : f32 to vector<1x1x128xf32>
      %c0_25 = arith.constant 0 : index
      %c0_26 = arith.constant 0 : index
      %c0_27 = arith.constant 0 : index
      %24 = vector.load %arg6[%c0_25, %c0_26, %c0_27] : memref<1x1x128xf32, #tpu.memory_space<vmem>>, vector<1x1x128xf32>
      tpu.vector_store %arg6[%c0_25, %c0_26, %c0_27], %23 {strides = array<i32>} : memref<1x1x128xf32, #tpu.memory_space<vmem>>, vector<1x1x128xf32>,
    } else {
    }
    %c0_6 = arith.constant 0 : index
    %c0_7 = arith.constant 0 : index
    %c0_8 = arith.constant 0 : index
    %8 = vector.load %arg5[%c0_6, %c0_7, %c0_8] : memref<1x1x128xf32, #tpu.memory_space<vmem>>, vector<1x1x128xf32>
    %cst_9 = arith.constant dense<0.000000e+00> : vector<128xf32>
    %9 = vector.multi_reduction <add>, %2, %cst_9 [0] : vector<128x128xf32> to vector<128xf32>
    %10 = vector.shape_cast %9 : vector<128xf32> to vector<1x128xf32>
    %11 = vector.shape_cast %10 : vector<1x128xf32> to vector<1x1x128xf32>
    %12 = arith.addf %8, %11 : vector<1x1x128xf32>
    %c0_10 = arith.constant 0 : index
    %c0_11 = arith.constant 0 : index
    %c0_12 = arith.constant 0 : index
    %13 = vector.load %arg5[%c0_10, %c0_11, %c0_12] : memref<1x1x128xf32, #tpu.memory_space<vmem>>, vector<1x1x128xf32>
    tpu.vector_store %arg5[%c0_10, %c0_11, %c0_12], %12 {strides = array<i32>} : memref<1x1x128xf32, #tpu.memory_space<vmem>>, vector<1x1x128xf32>,
    %c0_13 = arith.constant 0 : index
    %c0_14 = arith.constant 0 : index
    %c0_15 = arith.constant 0 : index
    %14 = vector.load %arg6[%c0_13, %c0_14, %c0_15] : memref<1x1x128xf32, #tpu.memory_space<vmem>>, vector<1x1x128xf32>
    %15 = arith.mulf %2, %2 : vector<128x128xf32>
    %cst_16 = arith.constant dense<0.000000e+00> : vector<128xf32>
    %16 = vector.multi_reduction <add>, %15, %cst_16 [0] : vector<128x128xf32> to vector<128xf32>
    %17 = vector.shape_cast %16 : vector<128xf32> to vector<1x128xf32>
    %18 = vector.shape_cast %17 : vector<1x128xf32> to vector<1x1x128xf32>
    %19 = arith.addf %14, %18 : vector<1x1x128xf32>
    %c0_17 = arith.constant 0 : index
    %c0_18 = arith.constant 0 : index
    %c0_19 = arith.constant 0 : index
    %20 = vector.load %arg6[%c0_17, %c0_18, %c0_19] : memref<1x1x128xf32, #tpu.memory_space<vmem>>, vector<1x1x128xf32>
    tpu.vector_store %arg6[%c0_17, %c0_18, %c0_19], %19 {strides = array<i32>} : memref<1x1x128xf32, #tpu.memory_space<vmem>>, vector<1x1x128xf32>,
    return
  }
  func.func @transform_0(%arg0: i32, %arg1: i32) -> (i32, i32) {
    %c2_i32 = arith.constant 2 : i32
    %0 = arith.muli %arg0, %c2_i32 : i32
    %1 = arith.addi %0, %arg1 : i32
    %c0_i32 = arith.constant 0 : i32
    %c0_i32_0 = arith.constant 0 : i32
    return %1, %c0_i32 : i32, i32
  }
  func.func @transform_1(%arg0: i32, %arg1: i32) -> (i32, i32) {
    %c0_i32 = arith.constant 0 : i32
    %c0_i32_0 = arith.constant 0 : i32
    %c0_i32_1 = arith.constant 0 : i32
    return %c0_i32, %c0_i32_0 : i32, i32
  }
  func.func @transform_2(%arg0: i32, %arg1: i32) -> (i32, i32) {
    %c2_i32 = arith.constant 2 : i32
    %0 = arith.muli %arg0, %c2_i32 : i32
    %1 = arith.addi %0, %arg1 : i32
    %c0_i32 = arith.constant 0 : i32
    %c0_i32_0 = arith.constant 0 : i32
    return %1, %c0_i32 : i32, i32
  }
  func.func @transform_3(%arg0: i32, %arg1: i32) -> (i32, i32, i32) {
    %c0_i32 = arith.constant 0 : i32
    %c0_i32_0 = arith.constant 0 : i32
    %c0_i32_1 = arith.constant 0 : i32
    return %arg0, %c0_i32, %c0_i32_0 : i32, i32, i32
  }
  func.func @transform_4(%arg0: i32, %arg1: i32) -> (i32, i32, i32) {
    %c0_i32 = arith.constant 0 : i32
    %c0_i32_0 = arith.constant 0 : i32
    %c0_i32_1 = arith.constant 0 : i32
    return %arg0, %c0_i32, %c0_i32_0 : i32, i32, i32
  }
}

module attributes {stable_mosaic.version = 11 : i64} {
  func.func @_conv_stats_kernel(%arg0: i32, %arg1: i32, %arg2: memref<128x48xbf16, #tpu.memory_space<vmem>>, %arg3: memref<48x128xbf16, #tpu.memory_space<vmem>>, %arg4: memref<128x128xbf16, #tpu.memory_space<vmem>>, %arg5: memref<1x1x128xf32, #tpu.memory_space<vmem>>, %arg6: memref<1x1x128xf32, #tpu.memory_space<vmem>>) attributes {dimension_semantics = [#tpu.dimension_semantics<parallel>, #tpu.dimension_semantics<arbitrary>], iteration_bounds = array<i64: 2, 2>, scalar_prefetch = 0 : i64, scratch_operands = 0 : i64, tpu.core_type = #tpu.core_type<tc>, window_params = [{transform_indices = @transform_0, window_bounds = array<i64: 128, 48>}, {pipeline_mode = #tpu.pipeline_mode<synchronous>, transform_indices = @transform_1, window_bounds = array<i64: 48, 128>}, {transform_indices = @transform_2, window_bounds = array<i64: 128, 128>}, {transform_indices = @transform_3, window_bounds = array<i64: 1, 1, 128>}, {transform_indices = @transform_4, window_bounds = array<i64: 1, 1, 128>}]} {
    %c0 = arith.constant 0 : index
    %c0_0 = arith.constant 0 : index
    %0 = vector.load %arg2[%c0, %c0_0] : memref<128x48xbf16, #tpu.memory_space<vmem>>, vector<128x48xbf16>
    %c0_1 = arith.constant 0 : index
    %c0_2 = arith.constant 0 : index
    %1 = vector.load %arg3[%c0_1, %c0_2] : memref<48x128xbf16, #tpu.memory_space<vmem>>, vector<48x128xbf16>
    %cst = arith.constant dense<0.000000e+00> : vector<128x128xf32>
    %2 = tpu.matmul %0, %1, %cst {dimension_numbers = #tpu.dot_dimension_numbers<[1], [0], [0], [1], [0, 0, 1, 1], [], []>} : vector<128x48xbf16>, vector<48x128xbf16>, vector<128x128xf32> -> vector<128x128xf32>
    %3 = arith.truncf %2 : vector<128x128xf32> to vector<128x128xbf16>
    %c0_3 = arith.constant 0 : index
    %c0_4 = arith.constant 0 : index
    %4 = vector.load %arg4[%c0_3, %c0_4] : memref<128x128xbf16, #tpu.memory_space<vmem>>, vector<128x128xbf16>
    tpu.vector_store %arg4[%c0_3, %c0_4], %3 {strides = array<i32>} : memref<128x128xbf16, #tpu.memory_space<vmem>>, vector<128x128xbf16>,
    %c0_i32 = arith.constant 0 : i32
    %5 = arith.cmpi eq, %arg1, %c0_i32 : i32
    %6 = arith.extui %5 : i1 to i32
    %c0_i32_5 = arith.constant 0 : i32
    %7 = arith.cmpi ne, %6, %c0_i32_5 : i32
    scf.if %7 {
      %cst_20 = arith.constant 0.000000e+00 : f32
      %21 = vector.broadcast %cst_20 : f32 to vector<1x1x128xf32>
      %c0_21 = arith.constant 0 : index
      %c0_22 = arith.constant 0 : index
      %c0_23 = arith.constant 0 : index
      %22 = vector.load %arg5[%c0_21, %c0_22, %c0_23] : memref<1x1x128xf32, #tpu.memory_space<vmem>>, vector<1x1x128xf32>
      tpu.vector_store %arg5[%c0_21, %c0_22, %c0_23], %21 {strides = array<i32>} : memref<1x1x128xf32, #tpu.memory_space<vmem>>, vector<1x1x128xf32>,
      %cst_24 = arith.constant 0.000000e+00 : f32
      %23 = vector.broadcast %cst_24 : f32 to vector<1x1x128xf32>
      %c0_25 = arith.constant 0 : index
      %c0_26 = arith.constant 0 : index
      %c0_27 = arith.constant 0 : index
      %24 = vector.load %arg6[%c0_25, %c0_26, %c0_27] : memref<1x1x128xf32, #tpu.memory_space<vmem>>, vector<1x1x128xf32>
      tpu.vector_store %arg6[%c0_25, %c0_26, %c0_27], %23 {strides = array<i32>} : memref<1x1x128xf32, #tpu.memory_space<vmem>>, vector<1x1x128xf32>,
    } else {
    }
    %c0_6 = arith.constant 0 : index
    %c0_7 = arith.constant 0 : index
    %c0_8 = arith.constant 0 : index
    %8 = vector.load %arg5[%c0_6, %c0_7, %c0_8] : memref<1x1x128xf32, #tpu.memory_space<vmem>>, vector<1x1x128xf32>
    %cst_9 = arith.constant dense<0.000000e+00> : vector<128xf32>
    %9 = vector.multi_reduction <add>, %2, %cst_9 [0] : vector<128x128xf32> to vector<128xf32>
    %10 = vector.shape_cast %9 : vector<128xf32> to vector<1x128xf32>
    %11 = vector.shape_cast %10 : vector<1x128xf32> to vector<1x1x128xf32>
    %12 = arith.addf %8, %11 : vector<1x1x128xf32>
    %c0_10 = arith.constant 0 : index
    %c0_11 = arith.constant 0 : index
    %c0_12 = arith.constant 0 : index
    %13 = vector.load %arg5[%c0_10, %c0_11, %c0_12] : memref<1x1x128xf32, #tpu.memory_space<vmem>>, vector<1x1x128xf32>
    tpu.vector_store %arg5[%c0_10, %c0_11, %c0_12], %12 {strides = array<i32>} : memref<1x1x128xf32, #tpu.memory_space<vmem>>, vector<1x1x128xf32>,
    %c0_13 = arith.constant 0 : index
    %c0_14 = arith.constant 0 : index
    %c0_15 = arith.constant 0 : index
    %14 = vector.load %arg6[%c0_13, %c0_14, %c0_15] : memref<1x1x128xf32, #tpu.memory_space<vmem>>, vector<1x1x128xf32>
    %15 = arith.mulf %2, %2 : vector<128x128xf32>
    %cst_16 = arith.constant dense<0.000000e+00> : vector<128xf32>
    %16 = vector.multi_reduction <add>, %15, %cst_16 [0] : vector<128x128xf32> to vector<128xf32>
    %17 = vector.shape_cast %16 : vector<128xf32> to vector<1x128xf32>
    %18 = vector.shape_cast %17 : vector<1x128xf32> to vector<1x1x128xf32>
    %19 = arith.addf %14, %18 : vector<1x1x128xf32>
    %c0_17 = arith.constant 0 : index
    %c0_18 = arith.constant 0 : index
    %c0_19 = arith.constant 0 : index
    %20 = vector.load %arg6[%c0_17, %c0_18, %c0_19] : memref<1x1x128xf32, #tpu.memory_space<vmem>>, vector<1x1x128xf32>
    tpu.vector_store %arg6[%c0_17, %c0_18, %c0_19], %19 {strides = array<i32>} : memref<1x1x128xf32, #tpu.memory_space<vmem>>, vector<1x1x128xf32>,
    return
  }
  func.func @transform_0(%arg0: i32, %arg1: i32) -> (i32, i32) {
    %c2_i32 = arith.constant 2 : i32
    %0 = arith.muli %arg0, %c2_i32 : i32
    %1 = arith.addi %0, %arg1 : i32
    %c0_i32 = arith.constant 0 : i32
    %c0_i32_0 = arith.constant 0 : i32
    return %1, %c0_i32 : i32, i32
  }
  func.func @transform_1(%arg0: i32, %arg1: i32) -> (i32, i32) {
    %c0_i32 = arith.constant 0 : i32
    %c0_i32_0 = arith.constant 0 : i32
    %c0_i32_1 = arith.constant 0 : i32
    return %c0_i32, %c0_i32_0 : i32, i32
  }
  func.func @transform_2(%arg0: i32, %arg1: i32) -> (i32, i32) {
    %c2_i32 = arith.constant 2 : i32
    %0 = arith.muli %arg0, %c2_i32 : i32
    %1 = arith.addi %0, %arg1 : i32
    %c0_i32 = arith.constant 0 : i32
    %c0_i32_0 = arith.constant 0 : i32
    return %1, %c0_i32 : i32, i32
  }
  func.func @transform_3(%arg0: i32, %arg1: i32) -> (i32, i32, i32) {
    %c0_i32 = arith.constant 0 : i32
    %c0_i32_0 = arith.constant 0 : i32
    %c0_i32_1 = arith.constant 0 : i32
    return %arg0, %c0_i32, %c0_i32_0 : i32, i32, i32
  }
  func.func @transform_4(%arg0: i32, %arg1: i32) -> (i32, i32, i32) {
    %c0_i32 = arith.constant 0 : i32
    %c0_i32_0 = arith.constant 0 : i32
    %c0_i32_1 = arith.constant 0 : i32
    return %arg0, %c0_i32, %c0_i32_0 : i32, i32, i32
  }
}

</mosaic_0001>

<llo_original>
// kernel: tpu_custom_call.1
$region0: #{tpu_custom_call.1}
  #allocation0 [shape = 'u32[]', space=smem, size = 0x4, offset = 0x4, fixed_abs, tag = 'smem constant byte address 0x4 - core index']
  #allocation1 [shape = 'u32[144,128]{1,0:T(1,128)}', space=vmem, size = 0x12000, scoped, tag = 'internal scratch']
  %s0 = inlined_call_operand.vmem [shape: bf16[512,48], index: 0, kind: input, shape index: {}]
  %s1 = inlined_call_operand.vmem [shape: bf16[48,128], index: 1, kind: input, shape index: {}]
  %s2 = inlined_call_operand.hbm [shape: bf16[512,128], index: 2, kind: output, shape index: {0}]
  %s3 = inlined_call_operand.hbm [shape: f32[2,1,128], index: 3, kind: output, shape index: {1}]
  %s4 = inlined_call_operand.hbm [shape: f32[2,1,128], index: 4, kind: output, shape index: {2}]
  %5 = xla_tuple %s2, %s3, %s4
  %s6 = sld [smem:[#allocation0]]
  $region61: #{tpu_custom_call.1} parent=0
    _
  %s8 = ssub.s32 1, %s6
  %s9 = scalar_select 0, %s8, %s6
  $region1: #{tpu_custom_call.1} parent=0
    #allocation2 [shape = 'u8[65536]{0}', space=vmem, size = 0x10000, scoped, tag = 'output window, operand 0']
    #allocation3 [shape = 's32[2]{0}', space=sflag, size = 0x8, scoped, tag = 'scoped memory for tpu_custom_call.1']
    #allocation4 [shape = 'u8[1024]{0}', space=vmem, size = 0x400, scoped, tag = 'output window, operand 1']
    #allocation5 [shape = 's32[2]{0}', space=sflag, size = 0x8, scoped, tag = 'scoped memory for tpu_custom_call.1']
    #allocation6 [shape = 'u8[1024]{0}', space=vmem, size = 0x400, scoped, tag = 'output window, operand 2']
    %10 = vsyncpa [#allocation3], 0
    %s11 = scalar_lea.sflag [#allocation3], 1
    %12 = vsyncpa %s11, 0
    %13 = vsyncpa [#allocation5], 0
    %s14 = scalar_lea.sflag [#allocation5], 1
    %15 = vsyncpa %s14, 0
    loop: start=0, step=1, limit=6
    $region2: #{tpu_custom_call.1} parent=1 // loop_pre_header
      _
    $region3: #{tpu_custom_call.1} parent=1 // loop_header
      %s17 = sphi 0, %s21
      %p18 = scmp.ge.s32.totalorder %s17, 6
      %s24 = sphi 0, %s36
      %s25 = sphi 0, %s32
      %s26 = sphi 0, %s24
      %s27 = sphi 0, %s25
      %s28 = sphi 0, %s26
      %s29 = sphi 0, %s27
      %s43 = sphi 0, %s45
      %s46 = sphi 0, %s43
      %s47 = sphi 0, %s46
      %s63 = sphi 0, %s47
      %s67 = sphi 0, %s67
      %s69 = sphi 0, %s67
      %s70 = sphi 0, %s69
      %s84 = sphi 0, %s70
      %s94 = sphi 0, %s96
      %s97 = sphi 0, %s94
      %s98 = sphi 0, %s97
      %s114 = sphi 0, %s98
      %s120 = sphi 0, %s122
      %s123 = sphi 0, %s120
      %s124 = sphi 0, %s123
      %s140 = sphi 0, %s124
      %s146 = sphi 0, %s148
      %s149 = sphi 0, %s146
      %s150 = sphi 0, %s149
      %s166 = sphi 0, %s150
    $region4: #{tpu_custom_call.1} parent=1 // loop_header_branch
      %20 = sbr.rel (%p18) target = $region8
    $region5: #{tpu_custom_call.1} parent=1 // loop_body
      %s22 = ssub.s32 %s17, 1
      %s23 = ssub.s32 %s17, 2
      %s30 = sadd.s32 1, %s25
      %p31 = scmp.ge.s32.totalorder %s30, 2
      %s32 = scalar_select %p31, 0, %s30
      %s33 = sadd.s32 1, %s24
      %s34 = scalar_select %p31, %s33, %s24
      %p35 = scmp.ge.s32.totalorder %s34, 2
      %s36 = scalar_select %p35, 0, %s34
      %s37 = smul.u32 %s24, 2
      %s38 = sadd.s32 %s37, %s25
      %s39 = smul.u32 %s36, 2
      %s40 = sadd.s32 %s39, %s32
      %s41 = ssub.s32 %s38, %s40
      %p42 = scmp.eq.s32.totalorder %s41, 0
      %s44 = sadd.s32 %s43, 1
      %s45 = scalar_select %p42, %s43, %s44
      %p48 = pneg %p42
      %p49 = scmp.eq.s32.totalorder %s17, 3
      %p50 = por %p48, %p49
      %p51 = scmp.ne.s32.totalorder %s43, %s46
      %p52 = scmp.eq.s32.totalorder %s17, 0
      %p53 = por %p51, %p52
      %p54 = scmp.ne.s32.totalorder %s43, %s46
      %p55 = scmp.eq.s32.totalorder %s22, 3
      %p56 = por %p54, %p55
      %p57 = scmp.ne.s32.totalorder %s46, %s47
      %p58 = scmp.eq.s32.totalorder %s22, 0
      %p59 = por %p57, %p58
      %p60 = scmp.ne.s32.totalorder %s46, %s47
      %p61 = scmp.eq.s32.totalorder %s23, 3
      %p62 = por %p60, %p61
      %p64 = scmp.ne.s32.totalorder %s47, %s63
      %p65 = scmp.eq.s32.totalorder %s23, 0
      %p66 = por %p64, %p65
      %s68 = sadd.s32 %s67, 1
      %p71 = scmp.eq.s32.totalorder %s17, 3
      %p72 = scmp.ne.s32.totalorder %s67, %s69
      %p73 = scmp.eq.s32.totalorder %s17, 0
      %p74 = por %p72, %p73
      %p75 = scmp.ne.s32.totalorder %s67, %s69
      %p76 = scmp.eq.s32.totalorder %s22, 3
      %p77 = por %p75, %p76
      %p78 = scmp.ne.s32.totalorder %s69, %s70
      %p79 = scmp.eq.s32.totalorder %s22, 0
      %p80 = por %p78, %p79
      %p81 = scmp.ne.s32.totalorder %s69, %s70
      %p82 = scmp.eq.s32.totalorder %s23, 3
      %p83 = por %p81, %p82
      %p85 = scmp.ne.s32.totalorder %s70, %s84
      %p86 = scmp.eq.s32.totalorder %s23, 0
      %p87 = por %p85, %p86
      %s88 = smul.u32 %s24, 2
      %s89 = sadd.s32 %s88, %s25
      %s90 = smul.u32 %s36, 2
      %s91 = sadd.s32 %s90, %s32
      %s92 = ssub.s32 %s89, %s91
      %p93 = scmp.eq.s32.totalorder %s92, 0
      %s95 = sadd.s32 %s94, 1
      %s96 = scalar_select %p93, %s94, %s95
      %p99 = pneg %p93
      %p100 = scmp.eq.s32.totalorder %s17, 3
      %p101 = por %p99, %p100
      %p102 = scmp.ne.s32.totalorder %s94, %s97
      %p103 = scmp.eq.s32.totalorder %s17, 0
      %p104 = por %p102, %p103
      %p105 = scmp.ne.s32.totalorder %s94, %s97
      %p106 = scmp.eq.s32.totalorder %s22, 3
      %p107 = por %p105, %p106
      %p108 = scmp.ne.s32.totalorder %s97, %s98
      %p109 = scmp.eq.s32.totalorder %s22, 0
      %p110 = por %p108, %p109
      %p111 = scmp.ne.s32.totalorder %s97, %s98
      %p112 = scmp.eq.s32.totalorder %s23, 3
      %p113 = por %p111, %p112
      %p115 = scmp.ne.s32.totalorder %s98, %s114
      %p116 = scmp.eq.s32.totalorder %s23, 0
      %p117 = por %p115, %p116
      %s118 = ssub.s32 %s24, %s36
      %p119 = scmp.eq.s32.totalorder %s118, 0
      %s121 = sadd.s32 %s120, 1
      %s122 = scalar_select %p119, %s120, %s121
      %p125 = pneg %p119
      %p126 = scmp.eq.s32.totalorder %s17, 3
      %p127 = por %p125, %p126
      %p128 = scmp.ne.s32.totalorder %s120, %s123
      %p129 = scmp.eq.s32.totalorder %s17, 0
      %p130 = por %p128, %p129
      %p131 = scmp.ne.s32.totalorder %s120, %s123
      %p132 = scmp.eq.s32.totalorder %s22, 3
      %p133 = por %p131, %p132
      %p134 = scmp.ne.s32.totalorder %s123, %s124
      %p135 = scmp.eq.s32.totalorder %s22, 0
      %p136 = por %p134, %p135
      %p137 = scmp.ne.s32.totalorder %s123, %s124
      %p138 = scmp.eq.s32.totalorder %s23, 3
      %p139 = por %p137, %p138
      %p141 = scmp.ne.s32.totalorder %s124, %s140
      %p142 = scmp.eq.s32.totalorder %s23, 0
      %p143 = por %p141, %p142
      %s144 = ssub.s32 %s24, %s36
      %p145 = scmp.eq.s32.totalorder %s144, 0
      %s147 = sadd.s32 %s146, 1
      %s148 = scalar_select %p145, %s146, %s147
      %p151 = pneg %p145
      %p152 = scmp.eq.s32.totalorder %s17, 3
      %p153 = por %p151, %p152
      %p154 = scmp.ne.s32.totalorder %s146, %s149
      %p155 = scmp.eq.s32.totalorder %s17, 0
      %p156 = por %p154, %p155
      %p157 = scmp.ne.s32.totalorder %s146, %s149
      %p158 = scmp.eq.s32.totalorder %s22, 3
      %p159 = por %p157, %p158
      %p160 = scmp.ne.s32.totalorder %s149, %s150
      %p161 = scmp.eq.s32.totalorder %s22, 0
      %p162 = por %p160, %p161
      %p163 = scmp.ne.s32.totalorder %s149, %s150
      %p164 = scmp.eq.s32.totalorder %s23, 3
      %p165 = por %p163, %p164
      %p167 = scmp.ne.s32.totalorder %s150, %s166
      %p168 = scmp.eq.s32.totalorder %s23, 0
      %p169 = por %p167, %p168
      %p170 = scmp.le.s32.totalorder 1, %s17
      %p171 = scmp.lt.s32.totalorder %s17, 5
      %p172 = pnand %p170, %p171
      %p173 = pneg %p172
      // Predicated region
      $region9: #{tpu_custom_call.1} parent=5 // pred_check
        _
      $region10: #{tpu_custom_call.1} parent=5 // pred_check_branch
        %175 = sbr.rel (%p172) target = $region12
      $region11: #{tpu_custom_call.1} parent=5 // pred_region
        %s176 = ssub.s32 %s17, 1
        // Predicated region
        $region13: #{tpu_custom_call.1} parent=11 // pred_check
          %p177 = pneg %p80
        $region14: #{tpu_custom_call.1} parent=11 // pred_check_branch
          %179 = sbr.rel (%p177) target = $region16
        $region15: #{tpu_custom_call.1} parent=11 // pred_region
          _
        $region16: #{tpu_custom_call.1} parent=11 // pred_fallthru
          _
      $region12: #{tpu_custom_call.1} parent=5 // pred_fallthru
        _
      %p180 = scmp.lt.s32.totalorder %s17, 4
      // Predicated region
      $region17: #{tpu_custom_call.1} parent=5 // pred_check
        %p181 = pneg %p180
      $region18: #{tpu_custom_call.1} parent=5 // pred_check_branch
        %183 = sbr.rel (%p181) target = $region20
      $region19: #{tpu_custom_call.1} parent=5 // pred_region
        // Predicated region
        $region21: #{tpu_custom_call.1} parent=19 // pred_check
          %p184 = pneg %p53
        $region22: #{tpu_custom_call.1} parent=19 // pred_check_branch
          %186 = sbr.rel (%p184) target = $region24
        $region23: #{tpu_custom_call.1} parent=19 // pred_region
          %s187 = smul.u32 %s24, 2
          %s188 = sadd.s32 %s187, %s25
          %s189 = smul.u32 16, %s188
          %p190 = scmp.lt.s32.totalorder %s189, 63
          %s191 = scalar_select %p190, %s189, 63
          %s192 = smul.addr %s191, 4
          %s193 = scalar_lea.vmem %s0, %s192
          %s194 = smul.u32 %s24, 2
          %s195 = sadd.s32 %s194, %s25
          %s196 = smul.u32 16, %s195
        $region24: #{tpu_custom_call.1} parent=19 // pred_fallthru
          _
      $region20: #{tpu_custom_call.1} parent=5 // pred_fallthru
        _
      %p197 = scmp.le.s32.totalorder 1, %s17
      %p198 = scmp.lt.s32.totalorder %s17, 5
      %p199 = pnand %p197, %p198
      %p200 = pneg %p199
      // Predicated region
      $region25: #{tpu_custom_call.1} parent=5 // pred_check
        _
      $region26: #{tpu_custom_call.1} parent=5 // pred_check_branch
        %202 = sbr.rel (%p199) target = $region28
      $region27: #{tpu_custom_call.1} parent=5 // pred_region
        %s203 = ssub.s32 %s17, 1
        %s204 = smul.u32 %s26, 2
        %s205 = sadd.s32 %s204, %s27
        %s206 = smul.u32 16, %s205
        %p207 = scmp.lt.s32.totalorder %s206, 63
        %s208 = scalar_select %p207, %s206, 63
        %s209 = smul.addr %s208, 4
        %s210 = scalar_lea.vmem %s0, %s209
        %p211 = pneg %p59
        %p212 = pneg %p56
        %p213 = pneg %p80
        %p214 = pneg %p77
        %p215 = pneg %p110
        %p216 = pneg %p107
        %s217 = sand.u32 %s97, 1
        %s218 = scalar_lea.sflag [#allocation3], %s217
        %s219 = sand.u32 %s97, 1
        %s220 = smul.addr %s219, 64
        %s221 = scalar_lea.vmem [#allocation2], %s220
        %p222 = pneg %p136
        %p223 = pneg %p133
        %s224 = sand.u32 %s22, 1
        %s225 = scalar_lea.sflag [#allocation5], %s224
        %s226 = sand.u32 %s123, 1
        %s227 = scalar_lea.vmem [#allocation4], %s226
        %p228 = pneg %p162
        %p229 = pneg %p159
        %s230 = sand.u32 %s22, 1
        %s231 = scalar_lea.sflag [#allocation5], %s230
        %s232 = sand.u32 %s149, 1
        %s233 = scalar_lea.vmem [#allocation6], %s232
        %s234 = smul.u32 %s26, 2
        %s235 = sadd.s32 %s234, %s27
        %s236 = smul.u32 16, %s235
        %p237 = scmp.lt.s32.totalorder %s236, 63
        %s238 = scalar_select %p237, %s236, 63
        %s239 = smul.addr %s238, 4
        %s240 = scalar_lea.vmem %s0, %s239
        %s241 = smul.u32 %s26, 2
        %s242 = sadd.s32 %s241, %s27
        %s243 = smul.u32 16, %s242
        %s244 = smul.u32 %s26, 2
        %s245 = sadd.s32 %s244, %s27
        %s246 = smul.u32 16, %s245
        %v248 = vld [vmem:[%s240] sm:$0xf]
        %v249 = vld [vmem:[%s240 + $0x4] sm:$0xf]
        %v250 = vld [vmem:[%s240 + $0x8] sm:$0xf]
        %v251 = vld [vmem:[%s240 + $0xc] sm:$0xf]
        %v252 = vld [vmem:[%s240 + $0x10] sm:$0xf]
        %v253 = vld [vmem:[%s240 + $0x14] sm:$0xf]
        %v254 = vld [vmem:[%s240 + $0x18] sm:$0xf]
        %v255 = vld [vmem:[%s240 + $0x1c] sm:$0xf]
        %v256 = vld [vmem:[%s240 + $0x20] sm:$0xf]
        %v257 = vld [vmem:[%s240 + $0x24] sm:$0xf]
        %v258 = vld [vmem:[%s240 + $0x28] sm:$0xf]
        %v259 = vld [vmem:[%s240 + $0x2c] sm:$0xf]
        %v260 = vld [vmem:[%s240 + $0x30] sm:$0xf]
        %v261 = vld [vmem:[%s240 + $0x34] sm:$0xf]
        %v262 = vld [vmem:[%s240 + $0x38] sm:$0xf]
        %v263 = vld [vmem:[%s240 + $0x3c] sm:$0xf]
        %v264 = vld [vmem:[%s1] sm:$0xf]
        %v265 = vld [vmem:[%s1 + $0x4] sm:$0xf]
        %v266 = vld [vmem:[%s1 + $0x8] sm:$0xf]
        %v267 = vld [vmem:[%s1 + $0xc] sm:$0xf]
        %v268 = vld [vmem:[%s1 + $0x10] sm:$0xf]
        %v269 = vld [vmem:[%s1 + $0x14] sm:$0xf]
        %v286 = vunpack.c.l.b16 %v248
        %v287 = vunpack.c.l.b16 %v249
        %v288 = vunpack.c.l.b16 %v250
        %v289 = vunpack.c.l.b16 %v251
        %v290 = vunpack.c.l.b16 %v252
        %v291 = vunpack.c.l.b16 %v253
        %v292 = vunpack.c.l.b16 %v254
        %v293 = vunpack.c.l.b16 %v255
        %v294 = vunpack.c.l.b16 %v256
        %v295 = vunpack.c.l.b16 %v257
        %v296 = vunpack.c.l.b16 %v258
        %v297 = vunpack.c.l.b16 %v259
        %v298 = vunpack.c.l.b16 %v260
        %v299 = vunpack.c.l.b16 %v261
        %v300 = vunpack.c.l.b16 %v262
        %v301 = vunpack.c.l.b16 %v263
        %v302 = vpack.c.b16 %v287, %v286
        %v303 = vpack.c.b16 %v289, %v288
        %v304 = vpack.c.b16 %v291, %v290
        %v305 = vpack.c.b16 %v293, %v292
        %v306 = vpack.c.b16 %v295, %v294
        %v307 = vpack.c.b16 %v297, %v296
        %v308 = vpack.c.b16 %v299, %v298
        %v309 = vpack.c.b16 %v301, %v300
        %v316 = vunpack.c.l.b16 %v264
        %v317 = vunpack.c.l.b16 %v265
        %v318 = vunpack.c.l.b16 %v266
        %v319 = vunpack.c.l.b16 %v267
        %v320 = vunpack.c.l.b16 %v268
        %v321 = vunpack.c.l.b16 %v269
        %v322 = vpack.c.b16 %v317, %v316
        %v323 = vpack.c.b16 %v319, %v318
        %v324 = vpack.c.b16 %v321, %v320
        %vm328 = vcmask 392192
        %v330 = vsel %vm328, %v302, 0
        %v333 = vsel %vm328, %v303, 0
        %v336 = vsel %vm328, %v304, 0
        %v339 = vsel %vm328, %v305, 0
        %v342 = vsel %vm328, %v306, 0
        %v345 = vsel %vm328, %v307, 0
        %v348 = vsel %vm328, %v308, 0
        %v351 = vsel %vm328, %v309, 0
        %353 = vmatprep.subr.bf16.mxu0 0
        %354 = vmatpush1.bf16.msra.mxu0 %v322
        %355 = vmatprep.subr.bf16.mxu0 0
        %356 = vmatpush1.bf16.msra.mxu0 %v323
        %357 = vmatprep.subr.bf16.mxu0 0
        %358 = vmatpush1.bf16.msra.mxu0 %v324
        %359 = vmatprep.subr.bf16.mxu0 0
        %360 = vmatpush1.bf16.msra.mxu0 0
        %361 = vmatprep.subr.bf16.mxu0 0
        %362 = vmatpush1.bf16.msra.mxu0 0
        %363 = vmatprep.subr.bf16.mxu0 0
        %364 = vmatpush1.bf16.msra.mxu0 0
        %365 = vmatprep.subr.bf16.mxu0 0
        %366 = vmatpush1.bf16.msra.mxu0 0
        %367 = vmatprep.subr.bf16.mxu0 0
        %368 = vmatpush1.bf16.msra.mxu0 0
        %369 = vmatprep.subr.bf16.mxu0 0
        %370 = vmatpush1.bf16.msra.mxu0 0
        %371 = vmatprep.subr.bf16.mxu0 0
        %372 = vmatpush1.bf16.msra.mxu0 0
        %373 = vmatprep.subr.bf16.mxu0 0
        %374 = vmatpush1.bf16.msra.mxu0 0
        %375 = vmatprep.subr.bf16.mxu0 0
        %376 = vmatpush1.bf16.msra.mxu0 0
        %377 = vmatprep.subr.bf16.mxu0 0
        %378 = vmatpush1.bf16.msra.mxu0 0
        %379 = vmatprep.subr.bf16.mxu0 0
        %380 = vmatpush1.bf16.msra.mxu0 0
        %381 = vmatprep.subr.bf16.mxu0 0
        %382 = vmatpush1.bf16.msra.mxu0 0
        %383 = vmatprep.subr.bf16.mxu0 0
        %384 = vmatpush1.bf16.msra.mxu0 0
        %385 = vmatprep.mubr.bf16.mxu0 0
        %386 = vmatmul.mubr.bf16.gmra.mrb[0].mxu0 %v330
        %v387 = vpop.f32.mrb[0].mxu0
        %v388 = vadd.f32 0.0, %v387
        %v389 = vpop.f32.mrb[0].mxu0
        %v390 = vpop.f32.mrb[0].mxu0
        %v391 = vadd.f32 0.0, %v390
        %v392 = vpop.f32.mrb[0].mxu0
        %393 = vmatprep.mubr.bf16.mxu0 0
        %394 = vmatmul.mubr.bf16.gmra.mrb[0].mxu0 %v333
        %v395 = vpop.f32.mrb[0].mxu0
        %v396 = vadd.f32 0.0, %v395
        %v397 = vpop.f32.mrb[0].mxu0
        %v398 = vpop.f32.mrb[0].mxu0
        %v399 = vadd.f32 0.0, %v398
        %v400 = vpop.f32.mrb[0].mxu0
        %401 = vmatprep.mubr.bf16.mxu0 0
        %402 = vmatmul.mubr.bf16.gmra.mrb[0].mxu0 %v336
        %v403 = vpop.f32.mrb[0].mxu0
        %v404 = vadd.f32 0.0, %v403
        %v405 = vpop.f32.mrb[0].mxu0
        %v406 = vpop.f32.mrb[0].mxu0
        %v407 = vadd.f32 0.0, %v406
        %v408 = vpop.f32.mrb[0].mxu0
        %409 = vmatprep.mubr.bf16.mxu0 0
        %410 = vmatmul.mubr.bf16.gmra.mrb[0].mxu0 %v339
        %v411 = vpop.f32.mrb[0].mxu0
        %v412 = vadd.f32 0.0, %v411
        %v413 = vpop.f32.mrb[0].mxu0
        %v414 = vpop.f32.mrb[0].mxu0
        %v415 = vadd.f32 0.0, %v414
        %v416 = vpop.f32.mrb[0].mxu0
        %417 = vmatprep.mubr.bf16.mxu0 0
        %418 = vmatmul.mubr.bf16.gmra.mrb[0].mxu0 %v342
        %v419 = vpop.f32.mrb[0].mxu0
        %v420 = vadd.f32 0.0, %v419
        %v421 = vpop.f32.mrb[0].mxu0
        %v422 = vpop.f32.mrb[0].mxu0
        %v423 = vadd.f32 0.0, %v422
        %v424 = vpop.f32.mrb[0].mxu0
        %425 = vmatprep.mubr.bf16.mxu0 0
        %426 = vmatmul.mubr.bf16.gmra.mrb[0].mxu0 %v345
        %v427 = vpop.f32.mrb[0].mxu0
        %v428 = vadd.f32 0.0, %v427
        %v429 = vpop.f32.mrb[0].mxu0
        %v430 = vpop.f32.mrb[0].mxu0
        %v431 = vadd.f32 0.0, %v430
        %v432 = vpop.f32.mrb[0].mxu0
        %433 = vmatprep.mubr.bf16.mxu0 0
        %434 = vmatmul.mubr.bf16.gmra.mrb[0].mxu0 %v348
        %v435 = vpop.f32.mrb[0].mxu0
        %v436 = vadd.f32 0.0, %v435
        %v437 = vpop.f32.mrb[0].mxu0
        %v438 = vpop.f32.mrb[0].mxu0
        %v439 = vadd.f32 0.0, %v438
        %v440 = vpop.f32.mrb[0].mxu0
        %441 = vmatprep.mubr.bf16.mxu0 0
        %442 = vmatmul.mubr.bf16.gmra.mrb[0].mxu0 %v351
        %v443 = vpop.f32.mrb[0].mxu0
        %v444 = vadd.f32 0.0, %v443
        %v445 = vpop.f32.mrb[0].mxu0
        %v446 = vpop.f32.mrb[0].mxu0
        %v447 = vadd.f32 0.0, %v446
        %v448 = vpop.f32.mrb[0].mxu0
        %449 = vdwg.mxu0
        %v450 = vpack.c.bf16 %v391, %v388
        %v451 = vpack.c.bf16 %v399, %v396
        %v452 = vpack.c.bf16 %v407, %v404
        %v453 = vpack.c.bf16 %v415, %v412
        %v454 = vpack.c.bf16 %v423, %v420
        %v455 = vpack.c.bf16 %v431, %v428
        %v456 = vpack.c.bf16 %v439, %v436
        %v457 = vpack.c.bf16 %v447, %v444
        %v466 = vunpack.c.l.b16 %v450
        %v467 = vunpack.c.h.b16 %v450
        %v468 = vunpack.c.l.b16 %v451
        %v469 = vunpack.c.h.b16 %v451
        %v470 = vunpack.c.l.b16 %v452
        %v471 = vunpack.c.h.b16 %v452
        %v472 = vunpack.c.l.b16 %v453
        %v473 = vunpack.c.h.b16 %v453
        %v474 = vunpack.c.l.b16 %v454
        %v475 = vunpack.c.h.b16 %v454
        %v476 = vunpack.c.l.b16 %v455
        %v477 = vunpack.c.h.b16 %v455
        %v478 = vunpack.c.l.b16 %v456
        %v479 = vunpack.c.h.b16 %v456
        %v480 = vunpack.c.l.b16 %v457
        %v481 = vunpack.c.h.b16 %v457
        %v482 = vpack.c.b16 %v466, %v466
        %v483 = vpack.c.b16 %v467, %v467
        %v484 = vpack.c.b16 %v468, %v468
        %v485 = vpack.c.b16 %v469, %v469
        %v486 = vpack.c.b16 %v470, %v470
        %v487 = vpack.c.b16 %v471, %v471
        %v488 = vpack.c.b16 %v472, %v472
        %v489 = vpack.c.b16 %v473, %v473
        %v490 = vpack.c.b16 %v474, %v474
        %v491 = vpack.c.b16 %v475, %v475
        %v492 = vpack.c.b16 %v476, %v476
        %v493 = vpack.c.b16 %v477, %v477
        %v494 = vpack.c.b16 %v478, %v478
        %v495 = vpack.c.b16 %v479, %v479
        %v496 = vpack.c.b16 %v480, %v480
        %v497 = vpack.c.b16 %v481, %v481
        %514 = vst [vmem:[%s221] sm:$0xf] %v482
        %515 = vst [vmem:[%s221 + $0x4] sm:$0xf] %v483
        %516 = vst [vmem:[%s221 + $0x8] sm:$0xf] %v484
        %517 = vst [vmem:[%s221 + $0xc] sm:$0xf] %v485
        %518 = vst [vmem:[%s221 + $0x10] sm:$0xf] %v486
        %519 = vst [vmem:[%s221 + $0x14] sm:$0xf] %v487
        %520 = vst [vmem:[%s221 + $0x18] sm:$0xf] %v488
        %521 = vst [vmem:[%s221 + $0x1c] sm:$0xf] %v489
        %522 = vst [vmem:[%s221 + $0x20] sm:$0xf] %v490
        %523 = vst [vmem:[%s221 + $0x24] sm:$0xf] %v491
        %524 = vst [vmem:[%s221 + $0x28] sm:$0xf] %v492
        %525 = vst [vmem:[%s221 + $0x2c] sm:$0xf] %v493
        %526 = vst [vmem:[%s221 + $0x30] sm:$0xf] %v494
        %527 = vst [vmem:[%s221 + $0x34] sm:$0xf] %v495
        %528 = vst [vmem:[%s221 + $0x38] sm:$0xf] %v496
        %529 = vst [vmem:[%s221 + $0x3c] sm:$0xf] %v497
        %p530 = scmp.eq.s32.totalorder %s27, 0
        // Predicated region
        $region29: #{tpu_custom_call.1} parent=27 // pred_check
          %p531 = pneg %p530
        $region30: #{tpu_custom_call.1} parent=27 // pred_check_branch
          %533 = sbr.rel (%p531) target = $region32
        $region31: #{tpu_custom_call.1} parent=27 // pred_region
          %534 = vst [vmem:[%s227] sm:$0x1] 0.0
          %535 = vst [vmem:[%s233] sm:$0x1] 0.0
        $region32: #{tpu_custom_call.1} parent=27 // pred_fallthru
          _
        %v536 = vld [vmem:[%s227] sm:$0x1]
        %v537 = vadd.f32 %v388, %v391
        %v538 = vadd.f32 %v537, %v396
        %v539 = vadd.f32 %v538, %v399
        %v540 = vadd.f32 %v539, %v404
        %v541 = vadd.f32 %v540, %v407
        %v542 = vadd.f32 %v541, %v412
        %v543 = vadd.f32 %v542, %v415
        %v544 = vadd.f32 %v543, %v420
        %v545 = vadd.f32 %v544, %v423
        %v546 = vadd.f32 %v545, %v428
        %v547 = vadd.f32 %v546, %v431
        %v548 = vadd.f32 %v547, %v436
        %v549 = vadd.f32 %v548, %v439
        %v550 = vadd.f32 %v549, %v444
        %v551 = vadd.f32 %v550, %v447
        %v552 = vrot.slane %v551, 4
        %v553 = vadd.f32 %v551, %v552
        %v554 = vrot.slane %v553, 2
        %v555 = vadd.f32 %v553, %v554
        %v556 = vrot.slane %v555, 1
        %v557 = vadd.f32 %v555, %v556
        %v558 = vadd.f32 %v536, %v557
        %559 = vst [vmem:[%s227] sm:$0x1] %v558
        %v560 = vld [vmem:[%s233] sm:$0x1]
        %v561 = vmul.f32 %v388, %v388
        %v562 = vmul.f32 %v391, %v391
        %v563 = vmul.f32 %v396, %v396
        %v564 = vmul.f32 %v399, %v399
        %v565 = vmul.f32 %v404, %v404
        %v566 = vmul.f32 %v407, %v407
        %v567 = vmul.f32 %v412, %v412
        %v568 = vmul.f32 %v415, %v415
        %v569 = vmul.f32 %v420, %v420
        %v570 = vmul.f32 %v423, %v423
        %v571 = vmul.f32 %v428, %v428
        %v572 = vmul.f32 %v431, %v431
        %v573 = vmul.f32 %v436, %v436
        %v574 = vmul.f32 %v439, %v439
        %v575 = vmul.f32 %v444, %v444
        %v576 = vmul.f32 %v447, %v447
        %v577 = vadd.f32 %v561, %v562
        %v578 = vadd.f32 %v577, %v563
        %v579 = vadd.f32 %v578, %v564
        %v580 = vadd.f32 %v579, %v565
        %v581 = vadd.f32 %v580, %v566
        %v582 = vadd.f32 %v581, %v567
        %v583 = vadd.f32 %v582, %v568
        %v584 = vadd.f32 %v583, %v569
        %v585 = vadd.f32 %v584, %v570
        %v586 = vadd.f32 %v585, %v571
        %v587 = vadd.f32 %v586, %v572
        %v588 = vadd.f32 %v587, %v573
        %v589 = vadd.f32 %v588, %v574
        %v590 = vadd.f32 %v589, %v575
        %v591 = vadd.f32 %v590, %v576
        %v592 = vrot.slane %v591, 4
        %v593 = vadd.f32 %v591, %v592
        %v594 = vrot.slane %v593, 2
        %v595 = vadd.f32 %v593, %v594
        %v596 = vrot.slane %v595, 1
        %v597 = vadd.f32 %v595, %v596
        %v598 = vadd.f32 %v560, %v597
        %599 = vst [vmem:[%s233] sm:$0x1] %v598
        %s600 = sand.u32 %s97, 1
        %s601 = scalar_lea.sflag [#allocation3], %s600
        %s602 = sand.u32 %s97, 1
        %s603 = smul.addr %s602, 64
        %s604 = scalar_lea.vmem [#allocation2], %s603
        %s605 = sand.u32 %s22, 1
        %s606 = scalar_lea.sflag [#allocation5], %s605
        %s607 = sand.u32 %s123, 1
        %s608 = scalar_lea.vmem [#allocation4], %s607
        %s609 = sand.u32 %s22, 1
        %s610 = scalar_lea.sflag [#allocation5], %s609
        %s611 = sand.u32 %s149, 1
        %s612 = scalar_lea.vmem [#allocation6], %s611
        // Predicated region
        $region33: #{tpu_custom_call.1} parent=27 // pred_check
          %p613 = pneg %p107
        $region34: #{tpu_custom_call.1} parent=27 // pred_check_branch
          %615 = sbr.rel (%p613) target = $region36
        $region35: #{tpu_custom_call.1} parent=27 // pred_region
          %s616 = smul.u32 %s26, 2
          %s617 = sadd.s32 %s616, %s27
          %s618 = smul.u32 16, %s617
          %s620 = ssub.s32 1024, 1024
          %621 = vsyncadd %s601, %s620
          %s622 = smul.addr %s618, 64
          %s623 = scalar_lea.hbm %s2, %s622
          %s624 = sshll.u32 %s604, 4
          %s625 = int_to_ptr.vmem [resolvable:$true] %s624
          %630 = dma.vmem_to_hbm [thread:$0]  %s625, 1024, %s623, %s601, 64, 64, 4
        $region36: #{tpu_custom_call.1} parent=27 // pred_fallthru
          _
        // Predicated region
        $region37: #{tpu_custom_call.1} parent=27 // pred_check
          %p631 = pneg %p133
        $region38: #{tpu_custom_call.1} parent=27 // pred_check_branch
          %633 = sbr.rel (%p631) target = $region40
        $region39: #{tpu_custom_call.1} parent=27 // pred_region
          %s635 = ssub.s32 16, 16
          %636 = vsyncadd %s606, %s635
          %s637 = smul.addr %s26, 16
          %s638 = scalar_lea.hbm %s3, %s637
          %s640 = sshll.u32 %s608, 4
          %s641 = int_to_ptr.vmem [resolvable:$true] %s640
          %643 = dma.vmem_to_hbm [thread:$0]  %s641, 16, %s638, %s606
        $region40: #{tpu_custom_call.1} parent=27 // pred_fallthru
          _
        // Predicated region
        $region41: #{tpu_custom_call.1} parent=27 // pred_check
          %p644 = pneg %p159
        $region42: #{tpu_custom_call.1} parent=27 // pred_check_branch
          %646 = sbr.rel (%p644) target = $region44
        $region43: #{tpu_custom_call.1} parent=27 // pred_region
          %s648 = ssub.s32 16, 16
          %649 = vsyncadd %s610, %s648
          %s650 = smul.addr %s26, 16
          %s651 = scalar_lea.hbm %s4, %s650
          %s653 = sshll.u32 %s612, 4
          %s654 = int_to_ptr.vmem [resolvable:$true] %s653
          %656 = dma.vmem_to_hbm [thread:$0]  %s654, 16, %s651, %s610
        $region44: #{tpu_custom_call.1} parent=27 // pred_fallthru
          _
      $region28: #{tpu_custom_call.1} parent=5 // pred_fallthru
        _
      %p657 = scmp.le.s32.totalorder 2, %s17
      // Predicated region
      $region45: #{tpu_custom_call.1} parent=5 // pred_check
        %p658 = pneg %p657
      $region46: #{tpu_custom_call.1} parent=5 // pred_check_branch
        %660 = sbr.rel (%p658) target = $region48
      $region47: #{tpu_custom_call.1} parent=5 // pred_region
        %s661 = ssub.s32 %s17, 2
        // Predicated region
        $region49: #{tpu_custom_call.1} parent=47 // pred_check
          %p662 = pneg %p113
        $region50: #{tpu_custom_call.1} parent=47 // pred_check_branch
          %664 = sbr.rel (%p662) target = $region52
        $region51: #{tpu_custom_call.1} parent=47 // pred_region
          %s665 = sand.u32 %s98, 1
          %s666 = scalar_lea.sflag [#allocation3], %s665
          %s667 = sand.u32 %s98, 1
          %s668 = smul.addr %s667, 64
          %s669 = scalar_lea.vmem [#allocation2], %s668
          %670 = dma.done %s666, 1024
        $region52: #{tpu_custom_call.1} parent=47 // pred_fallthru
          _
        // Predicated region
        $region53: #{tpu_custom_call.1} parent=47 // pred_check
          %p671 = pneg %p139
        $region54: #{tpu_custom_call.1} parent=47 // pred_check_branch
          %673 = sbr.rel (%p671) target = $region56
        $region55: #{tpu_custom_call.1} parent=47 // pred_region
          %s674 = sand.u32 %s23, 1
          %s675 = scalar_lea.sflag [#allocation5], %s674
          %s676 = sand.u32 %s124, 1
          %s677 = scalar_lea.vmem [#allocation4], %s676
          %678 = dma.done %s675, 16
        $region56: #{tpu_custom_call.1} parent=47 // pred_fallthru
          _
        // Predicated region
        $region57: #{tpu_custom_call.1} parent=47 // pred_check
          %p679 = pneg %p165
        $region58: #{tpu_custom_call.1} parent=47 // pred_check_branch
          %681 = sbr.rel (%p679) target = $region60
        $region59: #{tpu_custom_call.1} parent=47 // pred_region
          %s682 = sand.u32 %s23, 1
          %s683 = scalar_lea.sflag [#allocation5], %s682
          %s684 = sand.u32 %s150, 1
          %s685 = scalar_lea.vmem [#allocation6], %s684
          %686 = dma.done %s683, 16
        $region60: #{tpu_custom_call.1} parent=47 // pred_fallthru
          _
      $region48: #{tpu_custom_call.1} parent=5 // pred_fallthru
        _
    $region6: #{tpu_custom_call.1} parent=1 // loop_footer
      %s21 = sadd.s32 1, %s17
    $region7: #{tpu_custom_call.1} parent=1 // loop_footer_branch
      %16 = sbr.rel target = $region3
    $region8: #{tpu_custom_call.1} parent=1 // loop_exit
      _
    %687 = vsyncpa [#allocation3], 1
    %s688 = scalar_lea.sflag [#allocation3], 1
    %689 = vsyncpa %s688, 1
    %690 = vsyncpa [#allocation5], 1
    %s691 = scalar_lea.sflag [#allocation5], 1
    %692 = vsyncpa %s691, 1

// kernel: tpu_custom_call.1
$region0: #{tpu_custom_call.1}
  #allocation0 [shape = 'u32[]', space=smem, size = 0x4, offset = 0x4, fixed_abs, tag = 'smem constant byte address 0x4 - core index']
  #allocation1 [shape = 'u32[144,128]{1,0:T(1,128)}', space=vmem, size = 0x12000, scoped, tag = 'internal scratch']
  %s0 = inlined_call_operand.vmem [shape: bf16[512,48], index: 0, kind: input, shape index: {}]
  %s1 = inlined_call_operand.vmem [shape: bf16[48,128], index: 1, kind: input, shape index: {}]
  %s2 = inlined_call_operand.hbm [shape: bf16[512,128], index: 2, kind: output, shape index: {0}]
  %s3 = inlined_call_operand.hbm [shape: f32[2,1,128], index: 3, kind: output, shape index: {1}]
  %s4 = inlined_call_operand.hbm [shape: f32[2,1,128], index: 4, kind: output, shape index: {2}]
  %5 = xla_tuple %s2, %s3, %s4
  %s6 = sld [smem:[#allocation0]]
  $region61: #{tpu_custom_call.1} parent=0
    _
  %s8 = ssub.s32 1, %s6
  %s9 = scalar_select 0, %s8, %s6
  $region1: #{tpu_custom_call.1} parent=0
    #allocation2 [shape = 'u8[65536]{0}', space=vmem, size = 0x10000, scoped, tag = 'output window, operand 0']
    #allocation3 [shape = 's32[2]{0}', space=sflag, size = 0x8, scoped, tag = 'scoped memory for tpu_custom_call.1']
    #allocation4 [shape = 'u8[1024]{0}', space=vmem, size = 0x400, scoped, tag = 'output window, operand 1']
    #allocation5 [shape = 's32[2]{0}', space=sflag, size = 0x8, scoped, tag = 'scoped memory for tpu_custom_call.1']
    #allocation6 [shape = 'u8[1024]{0}', space=vmem, size = 0x400, scoped, tag = 'output window, operand 2']
    %10 = vsyncpa [#allocation3], 0
    %s11 = scalar_lea.sflag [#allocation3], 1
    %12 = vsyncpa %s11, 0
    %13 = vsyncpa [#allocation5], 0
    %s14 = scalar_lea.sflag [#allocation5], 1
    %15 = vsyncpa %s14, 0
    loop: start=0, step=1, limit=6
    $region2: #{tpu_custom_call.1} parent=1 // loop_pre_header
      _
    $region3: #{tpu_custom_call.1} parent=1 // loop_header
      %s17 = sphi 0, %s21
      %p18 = scmp.ge.s32.totalorder %s17, 6
      %s24 = sphi 0, %s36
      %s25 = sphi 0, %s32
      %s26 = sphi 0, %s24
      %s27 = sphi 0, %s25
      %s28 = sphi 0, %s26
      %s29 = sphi 0, %s27
      %s43 = sphi 0, %s45
      %s46 = sphi 0, %s43
      %s47 = sphi 0, %s46
      %s63 = sphi 0, %s47
      %s67 = sphi 0, %s67
      %s69 = sphi 0, %s67
      %s70 = sphi 0, %s69
      %s84 = sphi 0, %s70
      %s94 = sphi 0, %s96
      %s97 = sphi 0, %s94
      %s98 = sphi 0, %s97
      %s114 = sphi 0, %s98
      %s120 = sphi 0, %s122
      %s123 = sphi 0, %s120
      %s124 = sphi 0, %s123
      %s140 = sphi 0, %s124
      %s146 = sphi 0, %s148
      %s149 = sphi 0, %s146
      %s150 = sphi 0, %s149
      %s166 = sphi 0, %s150
    $region4: #{tpu_custom_call.1} parent=1 // loop_header_branch
      %20 = sbr.rel (%p18) target = $region8
    $region5: #{tpu_custom_call.1} parent=1 // loop_body
      %s22 = ssub.s32 %s17, 1
      %s23 = ssub.s32 %s17, 2
      %s30 = sadd.s32 1, %s25
      %p31 = scmp.ge.s32.totalorder %s30, 2
      %s32 = scalar_select %p31, 0, %s30
      %s33 = sadd.s32 1, %s24
      %s34 = scalar_select %p31, %s33, %s24
      %p35 = scmp.ge.s32.totalorder %s34, 2
      %s36 = scalar_select %p35, 0, %s34
      %s37 = smul.u32 %s24, 2
      %s38 = sadd.s32 %s37, %s25
      %s39 = smul.u32 %s36, 2
      %s40 = sadd.s32 %s39, %s32
      %s41 = ssub.s32 %s38, %s40
      %p42 = scmp.eq.s32.totalorder %s41, 0
      %s44 = sadd.s32 %s43, 1
      %s45 = scalar_select %p42, %s43, %s44
      %p48 = pneg %p42
      %p49 = scmp.eq.s32.totalorder %s17, 3
      %p50 = por %p48, %p49
      %p51 = scmp.ne.s32.totalorder %s43, %s46
      %p52 = scmp.eq.s32.totalorder %s17, 0
      %p53 = por %p51, %p52
      %p54 = scmp.ne.s32.totalorder %s43, %s46
      %p55 = scmp.eq.s32.totalorder %s22, 3
      %p56 = por %p54, %p55
      %p57 = scmp.ne.s32.totalorder %s46, %s47
      %p58 = scmp.eq.s32.totalorder %s22, 0
      %p59 = por %p57, %p58
      %p60 = scmp.ne.s32.totalorder %s46, %s47
      %p61 = scmp.eq.s32.totalorder %s23, 3
      %p62 = por %p60, %p61
      %p64 = scmp.ne.s32.totalorder %s47, %s63
      %p65 = scmp.eq.s32.totalorder %s23, 0
      %p66 = por %p64, %p65
      %s68 = sadd.s32 %s67, 1
      %p71 = scmp.eq.s32.totalorder %s17, 3
      %p72 = scmp.ne.s32.totalorder %s67, %s69
      %p73 = scmp.eq.s32.totalorder %s17, 0
      %p74 = por %p72, %p73
      %p75 = scmp.ne.s32.totalorder %s67, %s69
      %p76 = scmp.eq.s32.totalorder %s22, 3
      %p77 = por %p75, %p76
      %p78 = scmp.ne.s32.totalorder %s69, %s70
      %p79 = scmp.eq.s32.totalorder %s22, 0
      %p80 = por %p78, %p79
      %p81 = scmp.ne.s32.totalorder %s69, %s70
      %p82 = scmp.eq.s32.totalorder %s23, 3
      %p83 = por %p81, %p82
      %p85 = scmp.ne.s32.totalorder %s70, %s84
      %p86 = scmp.eq.s32.totalorder %s23, 0
      %p87 = por %p85, %p86
      %s88 = smul.u32 %s24, 2
      %s89 = sadd.s32 %s88, %s25
      %s90 = smul.u32 %s36, 2
      %s91 = sadd.s32 %s90, %s32
      %s92 = ssub.s32 %s89, %s91
      %p93 = scmp.eq.s32.totalorder %s92, 0
      %s95 = sadd.s32 %s94, 1
      %s96 = scalar_select %p93, %s94, %s95
      %p99 = pneg %p93
      %p100 = scmp.eq.s32.totalorder %s17, 3
      %p101 = por %p99, %p100
      %p102 = scmp.ne.s32.totalorder %s94, %s97
      %p103 = scmp.eq.s32.totalorder %s17, 0
      %p104 = por %p102, %p103
      %p105 = scmp.ne.s32.totalorder %s94, %s97
      %p106 = scmp.eq.s32.totalorder %s22, 3
      %p107 = por %p105, %p106
      %p108 = scmp.ne.s32.totalorder %s97, %s98
      %p109 = scmp.eq.s32.totalorder %s22, 0
      %p110 = por %p108, %p109
      %p111 = scmp.ne.s32.totalorder %s97, %s98
      %p112 = scmp.eq.s32.totalorder %s23, 3
      %p113 = por %p111, %p112
      %p115 = scmp.ne.s32.totalorder %s98, %s114
      %p116 = scmp.eq.s32.totalorder %s23, 0
      %p117 = por %p115, %p116
      %s118 = ssub.s32 %s24, %s36
      %p119 = scmp.eq.s32.totalorder %s118, 0
      %s121 = sadd.s32 %s120, 1
      %s122 = scalar_select %p119, %s120, %s121
      %p125 = pneg %p119
      %p126 = scmp.eq.s32.totalorder %s17, 3
      %p127 = por %p125, %p126
      %p128 = scmp.ne.s32.totalorder %s120, %s123
      %p129 = scmp.eq.s32.totalorder %s17, 0
      %p130 = por %p128, %p129
      %p131 = scmp.ne.s32.totalorder %s120, %s123
      %p132 = scmp.eq.s32.totalorder %s22, 3
      %p133 = por %p131, %p132
      %p134 = scmp.ne.s32.totalorder %s123, %s124
      %p135 = scmp.eq.s32.totalorder %s22, 0
      %p136 = por %p134, %p135
      %p137 = scmp.ne.s32.totalorder %s123, %s124
      %p138 = scmp.eq.s32.totalorder %s23, 3
      %p139 = por %p137, %p138
      %p141 = scmp.ne.s32.totalorder %s124, %s140
      %p142 = scmp.eq.s32.totalorder %s23, 0
      %p143 = por %p141, %p142
      %s144 = ssub.s32 %s24, %s36
      %p145 = scmp.eq.s32.totalorder %s144, 0
      %s147 = sadd.s32 %s146, 1
      %s148 = scalar_select %p145, %s146, %s147
      %p151 = pneg %p145
      %p152 = scmp.eq.s32.totalorder %s17, 3
      %p153 = por %p151, %p152
      %p154 = scmp.ne.s32.totalorder %s146, %s149
      %p155 = scmp.eq.s32.totalorder %s17, 0
      %p156 = por %p154, %p155
      %p157 = scmp.ne.s32.totalorder %s146, %s149
      %p158 = scmp.eq.s32.totalorder %s22, 3
      %p159 = por %p157, %p158
      %p160 = scmp.ne.s32.totalorder %s149, %s150
      %p161 = scmp.eq.s32.totalorder %s22, 0
      %p162 = por %p160, %p161
      %p163 = scmp.ne.s32.totalorder %s149, %s150
      %p164 = scmp.eq.s32.totalorder %s23, 3
      %p165 = por %p163, %p164
      %p167 = scmp.ne.s32.totalorder %s150, %s166
      %p168 = scmp.eq.s32.totalorder %s23, 0
      %p169 = por %p167, %p168
      %p170 = scmp.le.s32.totalorder 1, %s17
      %p171 = scmp.lt.s32.totalorder %s17, 5
      %p172 = pnand %p170, %p171
      %p173 = pneg %p172
      // Predicated region
      $region9: #{tpu_custom_call.1} parent=5 // pred_check
        _
      $region10: #{tpu_custom_call.1} parent=5 // pred_check_branch
        %175 = sbr.rel (%p172) target = $region12
      $region11: #{tpu_custom_call.1} parent=5 // pred_region
        %s176 = ssub.s32 %s17, 1
        // Predicated region
        $region13: #{tpu_custom_call.1} parent=11 // pred_check
          %p177 = pneg %p80
        $region14: #{tpu_custom_call.1} parent=11 // pred_check_branch
          %179 = sbr.rel (%p177) target = $region16
        $region15: #{tpu_custom_call.1} parent=11 // pred_region
          _
        $region16: #{tpu_custom_call.1} parent=11 // pred_fallthru
          _
      $region12: #{tpu_custom_call.1} parent=5 // pred_fallthru
        _
      %p180 = scmp.lt.s32.totalorder %s17, 4
      // Predicated region
      $region17: #{tpu_custom_call.1} parent=5 // pred_check
        %p181 = pneg %p180
      $region18: #{tpu_custom_call.1} parent=5 // pred_check_branch
        %183 = sbr.rel (%p181) target = $region20
      $region19: #{tpu_custom_call.1} parent=5 // pred_region
        // Predicated region
        $region21: #{tpu_custom_call.1} parent=19 // pred_check
          %p184 = pneg %p53
        $region22: #{tpu_custom_call.1} parent=19 // pred_check_branch
          %186 = sbr.rel (%p184) target = $region24
        $region23: #{tpu_custom_call.1} parent=19 // pred_region
          %s187 = smul.u32 %s24, 2
          %s188 = sadd.s32 %s187, %s25
          %s189 = smul.u32 16, %s188
          %p190 = scmp.lt.s32.totalorder %s189, 63
          %s191 = scalar_select %p190, %s189, 63
          %s192 = smul.addr %s191, 4
          %s193 = scalar_lea.vmem %s0, %s192
          %s194 = smul.u32 %s24, 2
          %s195 = sadd.s32 %s194, %s25
          %s196 = smul.u32 16, %s195
        $region24: #{tpu_custom_call.1} parent=19 // pred_fallthru
          _
      $region20: #{tpu_custom_call.1} parent=5 // pred_fallthru
        _
      %p197 = scmp.le.s32.totalorder 1, %s17
      %p198 = scmp.lt.s32.totalorder %s17, 5
      %p199 = pnand %p197, %p198
      %p200 = pneg %p199
      // Predicated region
      $region25: #{tpu_custom_call.1} parent=5 // pred_check
        _
      $region26: #{tpu_custom_call.1} parent=5 // pred_check_branch
        %202 = sbr.rel (%p199) target = $region28
      $region27: #{tpu_custom_call.1} parent=5 // pred_region
        %s203 = ssub.s32 %s17, 1
        %s204 = smul.u32 %s26, 2
        %s205 = sadd.s32 %s204, %s27
        %s206 = smul.u32 16, %s205
        %p207 = scmp.lt.s32.totalorder %s206, 63
        %s208 = scalar_select %p207, %s206, 63
        %s209 = smul.addr %s208, 4
        %s210 = scalar_lea.vmem %s0, %s209
        %p211 = pneg %p59
        %p212 = pneg %p56
        %p213 = pneg %p80
        %p214 = pneg %p77
        %p215 = pneg %p110
        %p216 = pneg %p107
        %s217 = sand.u32 %s97, 1
        %s218 = scalar_lea.sflag [#allocation3], %s217
        %s219 = sand.u32 %s97, 1
        %s220 = smul.addr %s219, 64
        %s221 = scalar_lea.vmem [#allocation2], %s220
        %p222 = pneg %p136
        %p223 = pneg %p133
        %s224 = sand.u32 %s22, 1
        %s225 = scalar_lea.sflag [#allocation5], %s224
        %s226 = sand.u32 %s123, 1
        %s227 = scalar_lea.vmem [#allocation4], %s226
        %p228 = pneg %p162
        %p229 = pneg %p159
        %s230 = sand.u32 %s22, 1
        %s231 = scalar_lea.sflag [#allocation5], %s230
        %s232 = sand.u32 %s149, 1
        %s233 = scalar_lea.vmem [#allocation6], %s232
        %s234 = smul.u32 %s26, 2
        %s235 = sadd.s32 %s234, %s27
        %s236 = smul.u32 16, %s235
        %p237 = scmp.lt.s32.totalorder %s236, 63
        %s238 = scalar_select %p237, %s236, 63
        %s239 = smul.addr %s238, 4
        %s240 = scalar_lea.vmem %s0, %s239
        %s241 = smul.u32 %s26, 2
        %s242 = sadd.s32 %s241, %s27
        %s243 = smul.u32 16, %s242
        %s244 = smul.u32 %s26, 2
        %s245 = sadd.s32 %s244, %s27
        %s246 = smul.u32 16, %s245
        %v248 = vld [vmem:[%s240] sm:$0xf]
        %v249 = vld [vmem:[%s240 + $0x4] sm:$0xf]
        %v250 = vld [vmem:[%s240 + $0x8] sm:$0xf]
        %v251 = vld [vmem:[%s240 + $0xc] sm:$0xf]
        %v252 = vld [vmem:[%s240 + $0x10] sm:$0xf]
        %v253 = vld [vmem:[%s240 + $0x14] sm:$0xf]
        %v254 = vld [vmem:[%s240 + $0x18] sm:$0xf]
        %v255 = vld [vmem:[%s240 + $0x1c] sm:$0xf]
        %v256 = vld [vmem:[%s240 + $0x20] sm:$0xf]
        %v257 = vld [vmem:[%s240 + $0x24] sm:$0xf]
        %v258 = vld [vmem:[%s240 + $0x28] sm:$0xf]
        %v259 = vld [vmem:[%s240 + $0x2c] sm:$0xf]
        %v260 = vld [vmem:[%s240 + $0x30] sm:$0xf]
        %v261 = vld [vmem:[%s240 + $0x34] sm:$0xf]
        %v262 = vld [vmem:[%s240 + $0x38] sm:$0xf]
        %v263 = vld [vmem:[%s240 + $0x3c] sm:$0xf]
        %v264 = vld [vmem:[%s1] sm:$0xf]
        %v265 = vld [vmem:[%s1 + $0x4] sm:$0xf]
        %v266 = vld [vmem:[%s1 + $0x8] sm:$0xf]
        %v267 = vld [vmem:[%s1 + $0xc] sm:$0xf]
        %v268 = vld [vmem:[%s1 + $0x10] sm:$0xf]
        %v269 = vld [vmem:[%s1 + $0x14] sm:$0xf]
        %v286 = vunpack.c.l.b16 %v248
        %v287 = vunpack.c.l.b16 %v249
        %v288 = vunpack.c.l.b16 %v250
        %v289 = vunpack.c.l.b16 %v251
        %v290 = vunpack.c.l.b16 %v252
        %v291 = vunpack.c.l.b16 %v253
        %v292 = vunpack.c.l.b16 %v254
        %v293 = vunpack.c.l.b16 %v255
        %v294 = vunpack.c.l.b16 %v256
        %v295 = vunpack.c.l.b16 %v257
        %v296 = vunpack.c.l.b16 %v258
        %v297 = vunpack.c.l.b16 %v259
        %v298 = vunpack.c.l.b16 %v260
        %v299 = vunpack.c.l.b16 %v261
        %v300 = vunpack.c.l.b16 %v262
        %v301 = vunpack.c.l.b16 %v263
        %v302 = vpack.c.b16 %v287, %v286
        %v303 = vpack.c.b16 %v289, %v288
        %v304 = vpack.c.b16 %v291, %v290
        %v305 = vpack.c.b16 %v293, %v292
        %v306 = vpack.c.b16 %v295, %v294
        %v307 = vpack.c.b16 %v297, %v296
        %v308 = vpack.c.b16 %v299, %v298
        %v309 = vpack.c.b16 %v301, %v300
        %v316 = vunpack.c.l.b16 %v264
        %v317 = vunpack.c.l.b16 %v265
        %v318 = vunpack.c.l.b16 %v266
        %v319 = vunpack.c.l.b16 %v267
        %v320 = vunpack.c.l.b16 %v268
        %v321 = vunpack.c.l.b16 %v269
        %v322 = vpack.c.b16 %v317, %v316
        %v323 = vpack.c.b16 %v319, %v318
        %v324 = vpack.c.b16 %v321, %v320
        %vm328 = vcmask 392192
        %v330 = vsel %vm328, %v302, 0
        %v333 = vsel %vm328, %v303, 0
        %v336 = vsel %vm328, %v304, 0
        %v339 = vsel %vm328, %v305, 0
        %v342 = vsel %vm328, %v306, 0
        %v345 = vsel %vm328, %v307, 0
        %v348 = vsel %vm328, %v308, 0
        %v351 = vsel %vm328, %v309, 0
        %353 = vmatprep.subr.bf16.mxu0 0
        %354 = vmatpush1.bf16.msra.mxu0 %v322
        %355 = vmatprep.subr.bf16.mxu0 0
        %356 = vmatpush1.bf16.msra.mxu0 %v323
        %357 = vmatprep.subr.bf16.mxu0 0
        %358 = vmatpush1.bf16.msra.mxu0 %v324
        %359 = vmatprep.subr.bf16.mxu0 0
        %360 = vmatpush1.bf16.msra.mxu0 0
        %361 = vmatprep.subr.bf16.mxu0 0
        %362 = vmatpush1.bf16.msra.mxu0 0
        %363 = vmatprep.subr.bf16.mxu0 0
        %364 = vmatpush1.bf16.msra.mxu0 0
        %365 = vmatprep.subr.bf16.mxu0 0
        %366 = vmatpush1.bf16.msra.mxu0 0
        %367 = vmatprep.subr.bf16.mxu0 0
        %368 = vmatpush1.bf16.msra.mxu0 0
        %369 = vmatprep.subr.bf16.mxu0 0
        %370 = vmatpush1.bf16.msra.mxu0 0
        %371 = vmatprep.subr.bf16.mxu0 0
        %372 = vmatpush1.bf16.msra.mxu0 0
        %373 = vmatprep.subr.bf16.mxu0 0
        %374 = vmatpush1.bf16.msra.mxu0 0
        %375 = vmatprep.subr.bf16.mxu0 0
        %376 = vmatpush1.bf16.msra.mxu0 0
        %377 = vmatprep.subr.bf16.mxu0 0
        %378 = vmatpush1.bf16.msra.mxu0 0
        %379 = vmatprep.subr.bf16.mxu0 0
        %380 = vmatpush1.bf16.msra.mxu0 0
        %381 = vmatprep.subr.bf16.mxu0 0
        %382 = vmatpush1.bf16.msra.mxu0 0
        %383 = vmatprep.subr.bf16.mxu0 0
        %384 = vmatpush1.bf16.msra.mxu0 0
        %385 = vmatprep.mubr.bf16.mxu0 0
        %386 = vmatmul.mubr.bf16.gmra.mrb[0].mxu0 %v330
        %v387 = vpop.f32.mrb[0].mxu0
        %v388 = vadd.f32 0.0, %v387
        %v389 = vpop.f32.mrb[0].mxu0
        %v390 = vpop.f32.mrb[0].mxu0
        %v391 = vadd.f32 0.0, %v390
        %v392 = vpop.f32.mrb[0].mxu0
        %393 = vmatprep.mubr.bf16.mxu0 0
        %394 = vmatmul.mubr.bf16.gmra.mrb[0].mxu0 %v333
        %v395 = vpop.f32.mrb[0].mxu0
        %v396 = vadd.f32 0.0, %v395
        %v397 = vpop.f32.mrb[0].mxu0
        %v398 = vpop.f32.mrb[0].mxu0
        %v399 = vadd.f32 0.0, %v398
        %v400 = vpop.f32.mrb[0].mxu0
        %401 = vmatprep.mubr.bf16.mxu0 0
        %402 = vmatmul.mubr.bf16.gmra.mrb[0].mxu0 %v336
        %v403 = vpop.f32.mrb[0].mxu0
        %v404 = vadd.f32 0.0, %v403
        %v405 = vpop.f32.mrb[0].mxu0
        %v406 = vpop.f32.mrb[0].mxu0
        %v407 = vadd.f32 0.0, %v406
        %v408 = vpop.f32.mrb[0].mxu0
        %409 = vmatprep.mubr.bf16.mxu0 0
        %410 = vmatmul.mubr.bf16.gmra.mrb[0].mxu0 %v339
        %v411 = vpop.f32.mrb[0].mxu0
        %v412 = vadd.f32 0.0, %v411
        %v413 = vpop.f32.mrb[0].mxu0
        %v414 = vpop.f32.mrb[0].mxu0
        %v415 = vadd.f32 0.0, %v414
        %v416 = vpop.f32.mrb[0].mxu0
        %417 = vmatprep.mubr.bf16.mxu0 0
        %418 = vmatmul.mubr.bf16.gmra.mrb[0].mxu0 %v342
        %v419 = vpop.f32.mrb[0].mxu0
        %v420 = vadd.f32 0.0, %v419
        %v421 = vpop.f32.mrb[0].mxu0
        %v422 = vpop.f32.mrb[0].mxu0
        %v423 = vadd.f32 0.0, %v422
        %v424 = vpop.f32.mrb[0].mxu0
        %425 = vmatprep.mubr.bf16.mxu0 0
        %426 = vmatmul.mubr.bf16.gmra.mrb[0].mxu0 %v345
        %v427 = vpop.f32.mrb[0].mxu0
        %v428 = vadd.f32 0.0, %v427
        %v429 = vpop.f32.mrb[0].mxu0
        %v430 = vpop.f32.mrb[0].mxu0
        %v431 = vadd.f32 0.0, %v430
        %v432 = vpop.f32.mrb[0].mxu0
        %433 = vmatprep.mubr.bf16.mxu0 0
        %434 = vmatmul.mubr.bf16.gmra.mrb[0].mxu0 %v348
        %v435 = vpop.f32.mrb[0].mxu0
        %v436 = vadd.f32 0.0, %v435
        %v437 = vpop.f32.mrb[0].mxu0
        %v438 = vpop.f32.mrb[0].mxu0
        %v439 = vadd.f32 0.0, %v438
        %v440 = vpop.f32.mrb[0].mxu0
        %441 = vmatprep.mubr.bf16.mxu0 0
        %442 = vmatmul.mubr.bf16.gmra.mrb[0].mxu0 %v351
        %v443 = vpop.f32.mrb[0].mxu0
        %v444 = vadd.f32 0.0, %v443
        %v445 = vpop.f32.mrb[0].mxu0
        %v446 = vpop.f32.mrb[0].mxu0
        %v447 = vadd.f32 0.0, %v446
        %v448 = vpop.f32.mrb[0].mxu0
        %449 = vdwg.mxu0
        %v450 = vpack.c.bf16 %v391, %v388
        %v451 = vpack.c.bf16 %v399, %v396
        %v452 = vpack.c.bf16 %v407, %v404
        %v453 = vpack.c.bf16 %v415, %v412
        %v454 = vpack.c.bf16 %v423, %v420
        %v455 = vpack.c.bf16 %v431, %v428
        %v456 = vpack.c.bf16 %v439, %v436
        %v457 = vpack.c.bf16 %v447, %v444
        %v466 = vunpack.c.l.b16 %v450
        %v467 = vunpack.c.h.b16 %v450
        %v468 = vunpack.c.l.b16 %v451
        %v469 = vunpack.c.h.b16 %v451
        %v470 = vunpack.c.l.b16 %v452
        %v471 = vunpack.c.h.b16 %v452
        %v472 = vunpack.c.l.b16 %v453
        %v473 = vunpack.c.h.b16 %v453
        %v474 = vunpack.c.l.b16 %v454
        %v475 = vunpack.c.h.b16 %v454
        %v476 = vunpack.c.l.b16 %v455
        %v477 = vunpack.c.h.b16 %v455
        %v478 = vunpack.c.l.b16 %v456
        %v479 = vunpack.c.h.b16 %v456
        %v480 = vunpack.c.l.b16 %v457
        %v481 = vunpack.c.h.b16 %v457
        %v482 = vpack.c.b16 %v466, %v466
        %v483 = vpack.c.b16 %v467, %v467
        %v484 = vpack.c.b16 %v468, %v468
        %v485 = vpack.c.b16 %v469, %v469
        %v486 = vpack.c.b16 %v470, %v470
        %v487 = vpack.c.b16 %v471, %v471
        %v488 = vpack.c.b16 %v472, %v472
        %v489 = vpack.c.b16 %v473, %v473
        %v490 = vpack.c.b16 %v474, %v474
        %v491 = vpack.c.b16 %v475, %v475
        %v492 = vpack.c.b16 %v476, %v476
        %v493 = vpack.c.b16 %v477, %v477
        %v494 = vpack.c.b16 %v478, %v478
        %v495 = vpack.c.b16 %v479, %v479
        %v496 = vpack.c.b16 %v480, %v480
        %v497 = vpack.c.b16 %v481, %v481
        %514 = vst [vmem:[%s221] sm:$0xf] %v482
        %515 = vst [vmem:[%s221 + $0x4] sm:$0xf] %v483
        %516 = vst [vmem:[%s221 + $0x8] sm:$0xf] %v484
        %517 = vst [vmem:[%s221 + $0xc] sm:$0xf] %v485
        %518 = vst [vmem:[%s221 + $0x10] sm:$0xf] %v486
        %519 = vst [vmem:[%s221 + $0x14] sm:$0xf] %v487
        %520 = vst [vmem:[%s221 + $0x18] sm:$0xf] %v488
        %521 = vst [vmem:[%s221 + $0x1c] sm:$0xf] %v489
        %522 = vst [vmem:[%s221 + $0x20] sm:$0xf] %v490
        %523 = vst [vmem:[%s221 + $0x24] sm:$0xf] %v491
        %524 = vst [vmem:[%s221 + $0x28] sm:$0xf] %v492
        %525 = vst [vmem:[%s221 + $0x2c] sm:$0xf] %v493
        %526 = vst [vmem:[%s221 + $0x30] sm:$0xf] %v494
        %527 = vst [vmem:[%s221 + $0x34] sm:$0xf] %v495
        %528 = vst [vmem:[%s221 + $0x38] sm:$0xf] %v496
        %529 = vst [vmem:[%s221 + $0x3c] sm:$0xf] %v497
        %p530 = scmp.eq.s32.totalorder %s27, 0
        // Predicated region
        $region29: #{tpu_custom_call.1} parent=27 // pred_check
          %p531 = pneg %p530
        $region30: #{tpu_custom_call.1} parent=27 // pred_check_branch
          %533 = sbr.rel (%p531) target = $region32
        $region31: #{tpu_custom_call.1} parent=27 // pred_region
          %534 = vst [vmem:[%s227] sm:$0x1] 0.0
          %535 = vst [vmem:[%s233] sm:$0x1] 0.0
        $region32: #{tpu_custom_call.1} parent=27 // pred_fallthru
          _
        %v536 = vld [vmem:[%s227] sm:$0x1]
        %v537 = vadd.f32 %v388, %v391
        %v538 = vadd.f32 %v537, %v396
        %v539 = vadd.f32 %v538, %v399
        %v540 = vadd.f32 %v539, %v404
        %v541 = vadd.f32 %v540, %v407
        %v542 = vadd.f32 %v541, %v412
        %v543 = vadd.f32 %v542, %v415
        %v544 = vadd.f32 %v543, %v420
        %v545 = vadd.f32 %v544, %v423
        %v546 = vadd.f32 %v545, %v428
        %v547 = vadd.f32 %v546, %v431
        %v548 = vadd.f32 %v547, %v436
        %v549 = vadd.f32 %v548, %v439
        %v550 = vadd.f32 %v549, %v444
        %v551 = vadd.f32 %v550, %v447
        %v552 = vrot.slane %v551, 4
        %v553 = vadd.f32 %v551, %v552
        %v554 = vrot.slane %v553, 2
        %v555 = vadd.f32 %v553, %v554
        %v556 = vrot.slane %v555, 1
        %v557 = vadd.f32 %v555, %v556
        %v558 = vadd.f32 %v536, %v557
        %559 = vst [vmem:[%s227] sm:$0x1] %v558
        %v560 = vld [vmem:[%s233] sm:$0x1]
        %v561 = vmul.f32 %v388, %v388
        %v562 = vmul.f32 %v391, %v391
        %v563 = vmul.f32 %v396, %v396
        %v564 = vmul.f32 %v399, %v399
        %v565 = vmul.f32 %v404, %v404
        %v566 = vmul.f32 %v407, %v407
        %v567 = vmul.f32 %v412, %v412
        %v568 = vmul.f32 %v415, %v415
        %v569 = vmul.f32 %v420, %v420
        %v570 = vmul.f32 %v423, %v423
        %v571 = vmul.f32 %v428, %v428
        %v572 = vmul.f32 %v431, %v431
        %v573 = vmul.f32 %v436, %v436
        %v574 = vmul.f32 %v439, %v439
        %v575 = vmul.f32 %v444, %v444
        %v576 = vmul.f32 %v447, %v447
        %v577 = vadd.f32 %v561, %v562
        %v578 = vadd.f32 %v577, %v563
        %v579 = vadd.f32 %v578, %v564
        %v580 = vadd.f32 %v579, %v565
        %v581 = vadd.f32 %v580, %v566
        %v582 = vadd.f32 %v581, %v567
        %v583 = vadd.f32 %v582, %v568
        %v584 = vadd.f32 %v583, %v569
        %v585 = vadd.f32 %v584, %v570
        %v586 = vadd.f32 %v585, %v571
        %v587 = vadd.f32 %v586, %v572
        %v588 = vadd.f32 %v587, %v573
        %v589 = vadd.f32 %v588, %v574
        %v590 = vadd.f32 %v589, %v575
        %v591 = vadd.f32 %v590, %v576
        %v592 = vrot.slane %v591, 4
        %v593 = vadd.f32 %v591, %v592
        %v594 = vrot.slane %v593, 2
        %v595 = vadd.f32 %v593, %v594
        %v596 = vrot.slane %v595, 1
        %v597 = vadd.f32 %v595, %v596
        %v598 = vadd.f32 %v560, %v597
        %599 = vst [vmem:[%s233] sm:$0x1] %v598
        %s600 = sand.u32 %s97, 1
        %s601 = scalar_lea.sflag [#allocation3], %s600
        %s602 = sand.u32 %s97, 1
        %s603 = smul.addr %s602, 64
        %s604 = scalar_lea.vmem [#allocation2], %s603
        %s605 = sand.u32 %s22, 1
        %s606 = scalar_lea.sflag [#allocation5], %s605
        %s607 = sand.u32 %s123, 1
        %s608 = scalar_lea.vmem [#allocation4], %s607
        %s609 = sand.u32 %s22, 1
        %s610 = scalar_lea.sflag [#allocation5], %s609
        %s611 = sand.u32 %s149, 1
        %s612 = scalar_lea.vmem [#allocation6], %s611
        // Predicated region
        $region33: #{tpu_custom_call.1} parent=27 // pred_check
          %p613 = pneg %p107
        $region34: #{tpu_custom_call.1} parent=27 // pred_check_branch
          %615 = sbr.rel (%p613) target = $region36
        $region35: #{tpu_custom_call.1} parent=27 // pred_region
          %s616 = smul.u32 %s26, 2
          %s617 = sadd.s32 %s616, %s27
          %s618 = smul.u32 16, %s617
          %s620 = ssub.s32 1024, 1024
          %621 = vsyncadd %s601, %s620
          %s622 = smul.addr %s618, 64
          %s623 = scalar_lea.hbm %s2, %s622
          %s624 = sshll.u32 %s604, 4
          %s625 = int_to_ptr.vmem [resolvable:$true] %s624
          %630 = dma.vmem_to_hbm [thread:$0]  %s625, 1024, %s623, %s601, 64, 64, 4
        $region36: #{tpu_custom_call.1} parent=27 // pred_fallthru
          _
        // Predicated region
        $region37: #{tpu_custom_call.1} parent=27 // pred_check
          %p631 = pneg %p133
        $region38: #{tpu_custom_call.1} parent=27 // pred_check_branch
          %633 = sbr.rel (%p631) target = $region40
        $region39: #{tpu_custom_call.1} parent=27 // pred_region
          %s635 = ssub.s32 16, 16
          %636 = vsyncadd %s606, %s635
          %s637 = smul.addr %s26, 16
          %s638 = scalar_lea.hbm %s3, %s637
          %s640 = sshll.u32 %s608, 4
          %s641 = int_to_ptr.vmem [resolvable:$true] %s640
          %643 = dma.vmem_to_hbm [thread:$0]  %s641, 16, %s638, %s606
        $region40: #{tpu_custom_call.1} parent=27 // pred_fallthru
          _
        // Predicated region
        $region41: #{tpu_custom_call.1} parent=27 // pred_check
          %p644 = pneg %p159
        $region42: #{tpu_custom_call.1} parent=27 // pred_check_branch
          %646 = sbr.rel (%p644) target = $region44
        $region43: #{tpu_custom_call.1} parent=27 // pred_region
          %s648 = ssub.s32 16, 16
          %649 = vsyncadd %s610, %s648
          %s650 = smul.addr %s26, 16
          %s651 = scalar_lea.hbm %s4, %s650
          %s653 = sshll.u32 %s612, 4
          %s654 = int_to_ptr.vmem [resolvable:$true] %s653
          %656 = dma.vmem_to_hbm [thread:$0]  %s654, 16, %s651, %s610
        $region44: #{tpu_custom_call.1} parent=27 // pred_fallthru
          _
      $region28: #{tpu_custom_call.1} parent=5 // pred_fallthru
        _
      %p657 = scmp.le.s32.totalorder 2, %s17
      // Predicated region
      $region45: #{tpu_custom_call.1} parent=5 // pred_check
        %p658 = pneg %p657
      $region46: #{tpu_custom_call.1} parent=5 // pred_check_branch
        %660 = sbr.rel (%p658) target = $region48
      $region47: #{tpu_custom_call.1} parent=5 // pred_region
        %s661 = ssub.s32 %s17, 2
        // Predicated region
        $region49: #{tpu_custom_call.1} parent=47 // pred_check
          %p662 = pneg %p113
        $region50: #{tpu_custom_call.1} parent=47 // pred_check_branch
          %664 = sbr.rel (%p662) target = $region52
        $region51: #{tpu_custom_call.1} parent=47 // pred_region
          %s665 = sand.u32 %s98, 1
          %s666 = scalar_lea.sflag [#allocation3], %s665
          %s667 = sand.u32 %s98, 1
          %s668 = smul.addr %s667, 64
          %s669 = scalar_lea.vmem [#allocation2], %s668
          %670 = dma.done %s666, 1024
        $region52: #{tpu_custom_call.1} parent=47 // pred_fallthru
          _
        // Predicated region
        $region53: #{tpu_custom_call.1} parent=47 // pred_check
          %p671 = pneg %p139
        $region54: #{tpu_custom_call.1} parent=47 // pred_check_branch
          %673 = sbr.rel (%p671) target = $region56
        $region55: #{tpu_custom_call.1} parent=47 // pred_region
          %s674 = sand.u32 %s23, 1
          %s675 = scalar_lea.sflag [#allocation5], %s674
          %s676 = sand.u32 %s124, 1
          %s677 = scalar_lea.vmem [#allocation4], %s676
          %678 = dma.done %s675, 16
        $region56: #{tpu_custom_call.1} parent=47 // pred_fallthru
          _
        // Predicated region
        $region57: #{tpu_custom_call.1} parent=47 // pred_check
          %p679 = pneg %p165
        $region58: #{tpu_custom_call.1} parent=47 // pred_check_branch
          %681 = sbr.rel (%p679) target = $region60
        $region59: #{tpu_custom_call.1} parent=47 // pred_region
          %s682 = sand.u32 %s23, 1
          %s683 = scalar_lea.sflag [#allocation5], %s682
          %s684 = sand.u32 %s150, 1
          %s685 = scalar_lea.vmem [#allocation6], %s684
          %686 = dma.done %s683, 16
        $region60: #{tpu_custom_call.1} parent=47 // pred_fallthru
          _
      $region48: #{tpu_custom_call.1} parent=5 // pred_fallthru
        _
    $region6: #{tpu_custom_call.1} parent=1 // loop_footer
      %s21 = sadd.s32 1, %s17
    $region7: #{tpu_custom_call.1} parent=1 // loop_footer_branch
      %16 = sbr.rel target = $region3
    $region8: #{tpu_custom_call.1} parent=1 // loop_exit
      _
    %687 = vsyncpa [#allocation3], 1
    %s688 = scalar_lea.sflag [#allocation3], 1
    %689 = vsyncpa %s688, 1
    %690 = vsyncpa [#allocation5], 1
    %s691 = scalar_lea.sflag [#allocation5], 1
    %692 = vsyncpa %s691, 1

</llo_original>
